<compile_context>
chip_gen: v7x
topology: tpu7x:2x2x1
jax: 0.10.0
libtpu: 0.0.40
codegen_flags: <defaults>
</compile_context>

<pallas_src>
import math
import functools

import jax
import jax.numpy as jnp
from jax.experimental import pallas as pl
from jax.experimental.pallas import tpu as pltpu


# ----------------------------------------------------------------------------
# Fused decoder-block kernel (grid = (batch,); one batch element per step)
# ----------------------------------------------------------------------------

def decoder_block_kernel(
    x_ref,             # (S_t, D)   f32  target activations for this batch
    enc_ref,           # (S_s, D)   f32  encoder output for this batch
    bias_self_ref,     # (S_t, S_t) f32  additive mask bias (0 / -1e30)
    bias_cross_ref,    # (S_t, S_s) f32
    wsa_ref, bsa_ref,  # self-attn : (4, D, D) bf16 [Wq,Wk,Wv,Wo], (4, D) f32
    wca_ref, bca_ref,  # cross-attn: (4, D, D) bf16,               (4, D) f32
    w1_ref, b1_ref,    # FFN: (D, Dff) bf16, (1, Dff) f32
    w2_ref, b2_ref,    #      (Dff, D) bf16, (1, D)   f32
    lng_ref, lnb_ref,  # LayerNorm gammas / betas for norm1/2/3: (3, D) f32
    o_ref,             # (S_t, D)   f32
    ctx_ref,           # scratch: (S_t, D) f32  per-head context assembly
    *, num_heads, d_k, eps):

    scale = 1.0 / math.sqrt(d_k)

    lng = lng_ref[...]                                    # (3, D) f32
    lnb = lnb_ref[...]

    def mm(a_bf, b_bf):
        # bf16 x bf16 MXU matmul with f32 accumulation.
        return jnp.dot(a_bf, b_bf, preferred_element_type=jnp.float32)

    def layer_norm(z, i):
        mu = jnp.mean(z, axis=-1, keepdims=True)
        var = jnp.mean(jnp.square(z - mu), axis=-1, keepdims=True)  # biased var
        zn = (z - mu) * jax.lax.rsqrt(var + eps)          # rsqrt -> EUP slot
        return zn * lng[i:i + 1, :] + lnb[i:i + 1, :]

    def attention(q_in_bf, kv_in_bf, bias, w_ref, b_ref):
        # q_in_bf: (S_q, D) bf16, kv_in_bf: (S_k, D) bf16, bias: (S_q, S_k) f32
        b = b_ref[...]                                    # (4, D) f32
        q = mm(q_in_bf, w_ref[0]) + b[0:1, :]             # (S_q, D) f32
        k = mm(kv_in_bf, w_ref[1]) + b[1:2, :]            # (S_k, D) f32
        v = mm(kv_in_bf, w_ref[2]) + b[2:3, :]            # (S_k, D) f32
        q_bf = q.astype(jnp.bfloat16)                     # hoisted casts
        k_bf = k.astype(jnp.bfloat16)
        v_bf = v.astype(jnp.bfloat16)
        for h in range(num_heads):                        # static unroll
            lo = h * d_k
            # scores_h = q_h @ k_h^T (contract last dims, no explicit transpose)
            s = jax.lax.dot_general(
                q_bf[:, lo:lo + d_k], k_bf[:, lo:lo + d_k],
                (((1,), (1,)), ((), ())),
                preferred_element_type=jnp.float32)
            s = s * scale + bias
            m = jnp.max(s, axis=-1, keepdims=True)
            e = jnp.exp(s - m)
            p = e * pl.reciprocal(jnp.sum(e, axis=-1, keepdims=True), approx=True)
            # Write this head's context into its lane slice; per-head
            # temporaries (s, e, p) die here -> bounded live ranges.
            ctx_ref[:, lo:lo + d_k] = mm(p.astype(jnp.bfloat16),
                                         v_bf[:, lo:lo + d_k])
        # ONE full-width output projection (full MXU contraction width).
        return mm(ctx_ref[...].astype(jnp.bfloat16), w_ref[3]) + b[3:4, :]

    x = x_ref[...]                                        # (S_t, D) f32
    enc_bf = enc_ref[...].astype(jnp.bfloat16)            # cast once

    # TODO(synk): nn.Dropout inside ResidualConnection is identity (eval mode);
    # training-mode dropout is not implemented.

    # Sublayer 1: masked self-attention (pre-norm residual).
    n_bf = layer_norm(x, 0).astype(jnp.bfloat16)
    x = x + attention(n_bf, n_bf, bias_self_ref[...], wsa_ref, bsa_ref)

    # Sublayer 2: cross-attention over the (raw) encoder output.
    n_bf = layer_norm(x, 1).astype(jnp.bfloat16)
    x = x + attention(n_bf, enc_bf, bias_cross_ref[...], wca_ref, bca_ref)

    # Sublayer 3: feed-forward (Linear -> ReLU -> Linear).
    n_bf = layer_norm(x, 2).astype(jnp.bfloat16)
    hdn = jnp.maximum(mm(n_bf, w1_ref[...]) + b1_ref[...], 0.0)
    x = x + mm(hdn.astype(jnp.bfloat16), w2_ref[...]) + b2_ref[...]

    o_ref[...] = x


# ----------------------------------------------------------------------------
# Wrapper
# ----------------------------------------------------------------------------

def _additive_bias(mask, s_q, s_k, neg=-1e30):
    """(B,1,*,S_k) keep-mask (1=keep, 0=mask) -> (B, s_q, s_k) additive bias.

    Compact per-batch bias (replaces masked_fill(-inf): fully-masked rows give
    a uniform distribution instead of NaN).
    """
    bsz = mask.shape[0]
    m = jnp.broadcast_to(mask.astype(jnp.float32), (bsz, 1, s_q, s_k))[:, 0]
    return jnp.where(m > 0.0, 0.0, neg)


def _vmem_limit_bytes(s_t, s_s, d_model, d_ff):
    bf16, f32 = 2, 4
    weights = (8 * d_model * d_model * bf16               # 2 attn stacks (Wq,Wk,Wv,Wo)
               + 2 * d_model * d_ff * bf16                # FFN W1, W2
               + (8 * d_model + d_ff + d_model + 6 * d_model) * f32)
    tiles = 2 * (2 * s_t * d_model + s_s * d_model        # x, out, enc (double-buffered)
                 + s_t * s_t + s_t * s_s) * f32           # mask biases
    scratch = s_t * d_model * f32                         # ctx scratch
    temps = (s_t * d_ff + 6 * s_t * d_model) * f32        # in-flight temporaries
    est = weights + tiles + scratch + temps
    # Cap at 48 MiB so the same config also fits v7x (64 MiB physical VMEM).
    return int(min(max(2 * est, 16 << 20), 48 << 20))


def decoder_block_forward(params, x, enc_out, tgt_mask, src_mask, *,
                          num_heads, eps=1e-6):
    bsz, s_t, d_model = x.shape
    s_s = enc_out.shape[1]
    d_k = d_model // num_heads

    wsa, bsa = params["self_attn"]["w"], params["self_attn"]["b"]
    wca, bca = params["cross_attn"]["w"], params["cross_attn"]["b"]
    w1, b1 = params["ff"]["w1"], params["ff"]["b1"]
    w2, b2 = params["ff"]["w2"], params["ff"]["b2"]
    lng, lnb = params["ln_g"], params["ln_b"]
    d_ff = w1.shape[1]

    bias_self = _additive_bias(tgt_mask, s_t, s_t)        # (B, S_t, S_t)
    bias_cross = _additive_bias(src_mask, s_t, s_s)       # (B, S_t, S_s)

    kern = functools.partial(decoder_block_kernel,
                             num_heads=num_heads, d_k=d_k, eps=eps)

    row = lambda b: (b, 0, 0)          # per-batch activation tiles
    const2 = lambda b: (0, 0)          # resident weights (fetched once)
    const3 = lambda b: (0, 0, 0)

    in_specs = [
        pl.BlockSpec((None, s_t, d_model), row),           # x
        pl.BlockSpec((None, s_s, d_model), row),           # enc_out
        pl.BlockSpec((None, s_t, s_t), row),               # bias_self
        pl.BlockSpec((None, s_t, s_s), row),               # bias_cross
        pl.BlockSpec(wsa.shape, const3),                   # self-attn weights
        pl.BlockSpec(bsa.shape, const2),
        pl.BlockSpec(wca.shape, const3),                   # cross-attn weights
        pl.BlockSpec(bca.shape, const2),
        pl.BlockSpec(w1.shape, const2),                    # FFN
        pl.BlockSpec(b1.shape, const2),
        pl.BlockSpec(w2.shape, const2),
        pl.BlockSpec(b2.shape, const2),
        pl.BlockSpec(lng.shape, const2),                   # LayerNorm params
        pl.BlockSpec(lnb.shape, const2),
    ]

    out = pl.pallas_call(
        kern,
        grid=(bsz,),
        out_shape=jax.ShapeDtypeStruct((bsz, s_t, d_model), jnp.float32),
        in_specs=in_specs,
        out_specs=pl.BlockSpec((None, s_t, d_model), row),
        scratch_shapes=[pltpu.VMEM((s_t, d_model), jnp.float32)],
        compiler_params=pltpu.CompilerParams(
            dimension_semantics=("parallel",),
            vmem_limit_bytes=_vmem_limit_bytes(s_t, s_s, d_model, d_ff)),
    )(x.astype(jnp.float32), enc_out.astype(jnp.float32),
      bias_self, bias_cross,
      wsa, bsa, wca, bca, w1, b1, w2, b2, lng, lnb)
    return out


# ----------------------------------------------------------------------------
# Deterministic synthetic parameters (nn.Linear-style init)
# ----------------------------------------------------------------------------

def _init_linear(key, d_in, d_out):
    kw, kb = jax.random.split(key)
    bound = 1.0 / math.sqrt(d_in)
    w = jax.random.uniform(kw, (d_in, d_out), jnp.float32, -bound, bound)
    b = jax.random.uniform(kb, (d_out,), jnp.float32, -bound, bound)
    return w, b


def _init_attention(key, d_model):
    keys = jax.random.split(key, 4)
    ws, bs = zip(*(_init_linear(k, d_model, d_model) for k in keys))
    return {"w": jnp.stack(ws).astype(jnp.bfloat16),       # (4, D, D): Wq, Wk, Wv, Wo
            "b": jnp.stack(bs).astype(jnp.float32)}        # (4, D)


def init_decoder_block(key, d_model, d_ff):
    k_sa, k_ca, k_f1, k_f2 = jax.random.split(key, 4)
    w1, b1 = _init_linear(k_f1, d_model, d_ff)
    w2, b2 = _init_linear(k_f2, d_ff, d_model)
    return {
        "self_attn": _init_attention(k_sa, d_model),
        "cross_attn": _init_attention(k_ca, d_model),
        "ff": {"w1": w1.astype(jnp.bfloat16), "b1": b1[None, :],
               "w2": w2.astype(jnp.bfloat16), "b2": b2[None, :]},
        "ln_g": jnp.ones((3, d_model), jnp.float32),       # norm1 / norm2 / norm3
        "ln_b": jnp.zeros((3, d_model), jnp.float32),
    }


# ----------------------------------------------------------------------------
# Main
# ----------------------------------------------------------------------------

if __name__ == "__main__":
    D_MODEL, NUM_HEADS, D_FF = 32, 2, 64
    B, S_TGT, S_SRC = 2, 8, 8

    key = jax.random.PRNGKey(0)
    kp, kx, ke = jax.random.split(key, 3)

    params = init_decoder_block(kp, D_MODEL, D_FF)
    x = jax.random.normal(kx, (B, S_TGT, D_MODEL), jnp.float32)
    enc_out = jax.random.normal(ke, (B, S_SRC, D_MODEL), jnp.float32)

    # tgt mask: causal lower-triangular; src mask: all-ones padding mask.
    tgt_mask = jnp.broadcast_to(
        jnp.tril(jnp.ones((S_TGT, S_TGT), jnp.float32))[None, None],
        (B, 1, S_TGT, S_TGT))
    src_mask = jnp.ones((B, 1, 1, S_SRC), jnp.float32)

    fwd = jax.jit(functools.partial(decoder_block_forward, num_heads=NUM_HEADS))
    out = fwd(params, x, enc_out, tgt_mask, src_mask)
    out = jax.block_until_ready(out)

    assert out.shape == (B, S_TGT, D_MODEL), out.shape
    assert bool(jnp.all(jnp.isfinite(out)))
    print("KERNEL_OK")
</pallas_src>

<mosaic_0001>
module attributes {stable_mosaic.version = 11 : i64} {
  func.func @decoder_block_kernel(%arg0: i32, %arg1: memref<1x8x32xf32, #tpu.memory_space<vmem>>, %arg2: memref<1x8x32xf32, #tpu.memory_space<vmem>>, %arg3: memref<1x8x8xf32, #tpu.memory_space<vmem>>, %arg4: memref<1x8x8xf32, #tpu.memory_space<vmem>>, %arg5: memref<4x32x32xbf16, #tpu.memory_space<vmem>>, %arg6: memref<4x32xf32, #tpu.memory_space<vmem>>, %arg7: memref<4x32x32xbf16, #tpu.memory_space<vmem>>, %arg8: memref<4x32xf32, #tpu.memory_space<vmem>>, %arg9: memref<32x64xbf16, #tpu.memory_space<vmem>>, %arg10: memref<1x64xf32, #tpu.memory_space<vmem>>, %arg11: memref<64x32xbf16, #tpu.memory_space<vmem>>, %arg12: memref<1x32xf32, #tpu.memory_space<vmem>>, %arg13: memref<3x32xf32, #tpu.memory_space<vmem>>, %arg14: memref<3x32xf32, #tpu.memory_space<vmem>>, %arg15: memref<1x8x32xf32, #tpu.memory_space<vmem>>, %arg16: memref<8x32xf32, #tpu.memory_space<vmem>>) attributes {dimension_semantics = [#tpu.dimension_semantics<parallel>], iteration_bounds = array<i64: 2>, scalar_prefetch = 0 : i64, scratch_operands = 1 : i64, tpu.core_type = #tpu.core_type<tc>, window_params = [{transform_indices = @transform_0, window_bounds = array<i64: 1, 8, 32>}, {transform_indices = @transform_1, window_bounds = array<i64: 1, 8, 32>}, {transform_indices = @transform_2, window_bounds = array<i64: 1, 8, 8>}, {transform_indices = @transform_3, window_bounds = array<i64: 1, 8, 8>}, {pipeline_mode = #tpu.pipeline_mode<synchronous>, transform_indices = @transform_4, window_bounds = array<i64: 4, 32, 32>}, {pipeline_mode = #tpu.pipeline_mode<synchronous>, transform_indices = @transform_5, window_bounds = array<i64: 4, 32>}, {pipeline_mode = #tpu.pipeline_mode<synchronous>, transform_indices = @transform_6, window_bounds = array<i64: 4, 32, 32>}, {pipeline_mode = #tpu.pipeline_mode<synchronous>, transform_indices = @transform_7, window_bounds = array<i64: 4, 32>}, {pipeline_mode = #tpu.pipeline_mode<synchronous>, transform_indices = @transform_8, window_bounds = array<i64: 32, 64>}, {pipeline_mode = #tpu.pipeline_mode<synchronous>, transform_indices = @transform_9, window_bounds = array<i64: 1, 64>}, {pipeline_mode = #tpu.pipeline_mode<synchronous>, transform_indices = @transform_10, window_bounds = array<i64: 64, 32>}, {pipeline_mode = #tpu.pipeline_mode<synchronous>, transform_indices = @transform_11, window_bounds = array<i64: 1, 32>}, {pipeline_mode = #tpu.pipeline_mode<synchronous>, transform_indices = @transform_12, window_bounds = array<i64: 3, 32>}, {pipeline_mode = #tpu.pipeline_mode<synchronous>, transform_indices = @transform_13, window_bounds = array<i64: 3, 32>}, {transform_indices = @transform_14, window_bounds = array<i64: 1, 8, 32>}]} {
    %c0 = arith.constant 0 : index
    %c0_0 = arith.constant 0 : index
    %0 = vector.load %arg13[%c0, %c0_0] : memref<3x32xf32, #tpu.memory_space<vmem>>, vector<3x32xf32>
    %c0_1 = arith.constant 0 : index
    %c0_2 = arith.constant 0 : index
    %1 = vector.load %arg14[%c0_1, %c0_2] : memref<3x32xf32, #tpu.memory_space<vmem>>, vector<3x32xf32>
    %c0_3 = arith.constant 0 : index
    %c0_4 = arith.constant 0 : index
    %c0_5 = arith.constant 0 : index
    %2 = vector.load %arg1[%c0_3, %c0_4, %c0_5] : memref<1x8x32xf32, #tpu.memory_space<vmem>>, vector<1x8x32xf32>
    %3 = vector.shape_cast %2 : vector<1x8x32xf32> to vector<8x32xf32>
    %c0_6 = arith.constant 0 : index
    %c0_7 = arith.constant 0 : index
    %c0_8 = arith.constant 0 : index
    %4 = vector.load %arg2[%c0_6, %c0_7, %c0_8] : memref<1x8x32xf32, #tpu.memory_space<vmem>>, vector<1x8x32xf32>
    %5 = vector.shape_cast %4 : vector<1x8x32xf32> to vector<8x32xf32>
    %6 = arith.truncf %5 : vector<8x32xf32> to vector<8x32xbf16>
    %cst = arith.constant dense<0.000000e+00> : vector<8xf32>
    %7 = vector.multi_reduction <add>, %3, %cst [1] : vector<8x32xf32> to vector<8xf32>
    %8 = vector.shape_cast %7 : vector<8xf32> to vector<8x1xf32>
    %cst_9 = arith.constant 3.200000e+01 : f32
    %9 = vector.broadcast %cst_9 : f32 to vector<8x1xf32>
    %10 = arith.divf %8, %9 : vector<8x1xf32>
    %11 = vector.broadcast %10 : vector<8x1xf32> to vector<8x32xf32>
    %12 = arith.subf %3, %11 : vector<8x32xf32>
    %13 = arith.mulf %12, %12 : vector<8x32xf32>
    %cst_10 = arith.constant dense<0.000000e+00> : vector<8xf32>
    %14 = vector.multi_reduction <add>, %13, %cst_10 [1] : vector<8x32xf32> to vector<8xf32>
    %15 = vector.shape_cast %14 : vector<8xf32> to vector<8x1xf32>
    %cst_11 = arith.constant 3.200000e+01 : f32
    %16 = vector.broadcast %cst_11 : f32 to vector<8x1xf32>
    %17 = arith.divf %15, %16 : vector<8x1xf32>
    %18 = vector.broadcast %10 : vector<8x1xf32> to vector<8x32xf32>
    %19 = arith.subf %3, %18 : vector<8x32xf32>
    %cst_12 = arith.constant 9.99999997E-7 : f32
    %20 = vector.broadcast %cst_12 : f32 to vector<8x1xf32>
    %21 = arith.addf %17, %20 : vector<8x1xf32>
    %22 = math.rsqrt %21 : vector<8x1xf32>
    %23 = vector.broadcast %22 : vector<8x1xf32> to vector<8x32xf32>
    %24 = arith.mulf %19, %23 : vector<8x32xf32>
    %25 = vector.extract_strided_slice %0 {offsets = [0, 0], sizes = [1, 32], strides = [1, 1]} : vector<3x32xf32> to vector<1x32xf32>
    %26 = vector.broadcast %25 : vector<1x32xf32> to vector<8x32xf32>
    %27 = arith.mulf %24, %26 : vector<8x32xf32>
    %28 = vector.extract_strided_slice %1 {offsets = [0, 0], sizes = [1, 32], strides = [1, 1]} : vector<3x32xf32> to vector<1x32xf32>
    %29 = vector.broadcast %28 : vector<1x32xf32> to vector<8x32xf32>
    %30 = arith.addf %27, %29 : vector<8x32xf32>
    %31 = arith.truncf %30 : vector<8x32xf32> to vector<8x32xbf16>
    %c0_13 = arith.constant 0 : index
    %c0_14 = arith.constant 0 : index
    %c0_15 = arith.constant 0 : index
    %32 = vector.load %arg3[%c0_13, %c0_14, %c0_15] : memref<1x8x8xf32, #tpu.memory_space<vmem>>, vector<1x8x8xf32>
    %33 = vector.shape_cast %32 : vector<1x8x8xf32> to vector<8x8xf32>
    %c0_16 = arith.constant 0 : index
    %c0_17 = arith.constant 0 : index
    %34 = vector.load %arg6[%c0_16, %c0_17] : memref<4x32xf32, #tpu.memory_space<vmem>>, vector<4x32xf32>
    %c0_18 = arith.constant 0 : index
    %c0_19 = arith.constant 0 : index
    %c0_20 = arith.constant 0 : index
    %35 = vector.load %arg5[%c0_18, %c0_19, %c0_20] : memref<4x32x32xbf16, #tpu.memory_space<vmem>>, vector<1x32x32xbf16>
    %36 = vector.shape_cast %35 : vector<1x32x32xbf16> to vector<32x32xbf16>
    %cst_21 = arith.constant dense<0.000000e+00> : vector<8x32xf32>
    %37 = tpu.matmul %31, %36, %cst_21 {dimension_numbers = #tpu.dot_dimension_numbers<[1], [0], [0], [1], [0, 0, 1, 1], [], []>} : vector<8x32xbf16>, vector<32x32xbf16>, vector<8x32xf32> -> vector<8x32xf32>
    %38 = vector.extract_strided_slice %34 {offsets = [0, 0], sizes = [1, 32], strides = [1, 1]} : vector<4x32xf32> to vector<1x32xf32>
    %39 = vector.broadcast %38 : vector<1x32xf32> to vector<8x32xf32>
    %40 = arith.addf %37, %39 : vector<8x32xf32>
    %c1 = arith.constant 1 : index
    %c0_22 = arith.constant 0 : index
    %c0_23 = arith.constant 0 : index
    %41 = vector.load %arg5[%c1, %c0_22, %c0_23] : memref<4x32x32xbf16, #tpu.memory_space<vmem>>, vector<1x32x32xbf16>
    %42 = vector.shape_cast %41 : vector<1x32x32xbf16> to vector<32x32xbf16>
    %cst_24 = arith.constant dense<0.000000e+00> : vector<8x32xf32>
    %43 = tpu.matmul %31, %42, %cst_24 {dimension_numbers = #tpu.dot_dimension_numbers<[1], [0], [0], [1], [0, 0, 1, 1], [], []>} : vector<8x32xbf16>, vector<32x32xbf16>, vector<8x32xf32> -> vector<8x32xf32>
    %44 = vector.extract_strided_slice %34 {offsets = [1, 0], sizes = [1, 32], strides = [1, 1]} : vector<4x32xf32> to vector<1x32xf32>
    %45 = vector.broadcast %44 : vector<1x32xf32> to vector<8x32xf32>
    %46 = arith.addf %43, %45 : vector<8x32xf32>
    %c2 = arith.constant 2 : index
    %c0_25 = arith.constant 0 : index
    %c0_26 = arith.constant 0 : index
    %47 = vector.load %arg5[%c2, %c0_25, %c0_26] : memref<4x32x32xbf16, #tpu.memory_space<vmem>>, vector<1x32x32xbf16>
    %48 = vector.shape_cast %47 : vector<1x32x32xbf16> to vector<32x32xbf16>
    %cst_27 = arith.constant dense<0.000000e+00> : vector<8x32xf32>
    %49 = tpu.matmul %31, %48, %cst_27 {dimension_numbers = #tpu.dot_dimension_numbers<[1], [0], [0], [1], [0, 0, 1, 1], [], []>} : vector<8x32xbf16>, vector<32x32xbf16>, vector<8x32xf32> -> vector<8x32xf32>
    %50 = vector.extract_strided_slice %34 {offsets = [2, 0], sizes = [1, 32], strides = [1, 1]} : vector<4x32xf32> to vector<1x32xf32>
    %51 = vector.broadcast %50 : vector<1x32xf32> to vector<8x32xf32>
    %52 = arith.addf %49, %51 : vector<8x32xf32>
    %53 = arith.truncf %40 : vector<8x32xf32> to vector<8x32xbf16>
    %54 = arith.truncf %46 : vector<8x32xf32> to vector<8x32xbf16>
    %55 = arith.truncf %52 : vector<8x32xf32> to vector<8x32xbf16>
    %56 = vector.extract_strided_slice %53 {offsets = [0, 0], sizes = [8, 16], strides = [1, 1]} : vector<8x32xbf16> to vector<8x16xbf16>
    %57 = vector.extract_strided_slice %54 {offsets = [0, 0], sizes = [8, 16], strides = [1, 1]} : vector<8x32xbf16> to vector<8x16xbf16>
    %cst_28 = arith.constant dense<0.000000e+00> : vector<8x8xf32>
    %58 = tpu.matmul %56, %57, %cst_28 {dimension_numbers = #tpu.dot_dimension_numbers<[1], [1], [0], [0], [0, 0, 1, 0], [], []>} : vector<8x16xbf16>, vector<8x16xbf16>, vector<8x8xf32> -> vector<8x8xf32>
    %cst_29 = arith.constant 2.500000e-01 : f32
    %59 = vector.broadcast %cst_29 : f32 to vector<8x8xf32>
    %60 = arith.mulf %58, %59 : vector<8x8xf32>
    %61 = arith.addf %60, %33 : vector<8x8xf32>
    %cst_30 = arith.constant dense<0xFF800000> : vector<8xf32>
    %62 = vector.multi_reduction <maximumf>, %61, %cst_30 [1] : vector<8x8xf32> to vector<8xf32>
    %63 = vector.shape_cast %62 : vector<8xf32> to vector<8x1xf32>
    %64 = vector.broadcast %63 : vector<8x1xf32> to vector<8x8xf32>
    %65 = arith.subf %61, %64 : vector<8x8xf32>
    %66 = math.exp %65 : vector<8x8xf32>
    %cst_31 = arith.constant dense<0.000000e+00> : vector<8xf32>
    %67 = vector.multi_reduction <add>, %66, %cst_31 [1] : vector<8x8xf32> to vector<8xf32>
    %68 = vector.shape_cast %67 : vector<8xf32> to vector<8x1xf32>
    %69 = tpu.reciprocal %68 {approx = true} : vector<8x1xf32> -> vector<8x1xf32>
    %70 = vector.broadcast %69 : vector<8x1xf32> to vector<8x8xf32>
    %71 = arith.mulf %66, %70 : vector<8x8xf32>
    %72 = arith.truncf %71 : vector<8x8xf32> to vector<8x8xbf16>
    %73 = vector.extract_strided_slice %55 {offsets = [0, 0], sizes = [8, 16], strides = [1, 1]} : vector<8x32xbf16> to vector<8x16xbf16>
    %cst_32 = arith.constant dense<0.000000e+00> : vector<8x16xf32>
    %74 = tpu.matmul %72, %73, %cst_32 {dimension_numbers = #tpu.dot_dimension_numbers<[1], [0], [0], [1], [0, 0, 1, 1], [], []>} : vector<8x8xbf16>, vector<8x16xbf16>, vector<8x16xf32> -> vector<8x16xf32>
    %c0_33 = arith.constant 0 : index
    %c0_34 = arith.constant 0 : index
    %75 = vector.load %arg16[%c0_33, %c0_34] : memref<8x32xf32, #tpu.memory_space<vmem>>, vector<8x16xf32>
    tpu.vector_store %arg16[%c0_33, %c0_34], %74 {strides = array<i32>} : memref<8x32xf32, #tpu.memory_space<vmem>>, vector<8x16xf32>,
    %76 = vector.extract_strided_slice %53 {offsets = [0, 16], sizes = [8, 16], strides = [1, 1]} : vector<8x32xbf16> to vector<8x16xbf16>
    %77 = vector.extract_strided_slice %54 {offsets = [0, 16], sizes = [8, 16], strides = [1, 1]} : vector<8x32xbf16> to vector<8x16xbf16>
    %cst_35 = arith.constant dense<0.000000e+00> : vector<8x8xf32>
    %78 = tpu.matmul %76, %77, %cst_35 {dimension_numbers = #tpu.dot_dimension_numbers<[1], [1], [0], [0], [0, 0, 1, 0], [], []>} : vector<8x16xbf16>, vector<8x16xbf16>, vector<8x8xf32> -> vector<8x8xf32>
    %cst_36 = arith.constant 2.500000e-01 : f32
    %79 = vector.broadcast %cst_36 : f32 to vector<8x8xf32>
    %80 = arith.mulf %78, %79 : vector<8x8xf32>
    %81 = arith.addf %80, %33 : vector<8x8xf32>
    %cst_37 = arith.constant dense<0xFF800000> : vector<8xf32>
    %82 = vector.multi_reduction <maximumf>, %81, %cst_37 [1] : vector<8x8xf32> to vector<8xf32>
    %83 = vector.shape_cast %82 : vector<8xf32> to vector<8x1xf32>
    %84 = vector.broadcast %83 : vector<8x1xf32> to vector<8x8xf32>
    %85 = arith.subf %81, %84 : vector<8x8xf32>
    %86 = math.exp %85 : vector<8x8xf32>
    %cst_38 = arith.constant dense<0.000000e+00> : vector<8xf32>
    %87 = vector.multi_reduction <add>, %86, %cst_38 [1] : vector<8x8xf32> to vector<8xf32>
    %88 = vector.shape_cast %87 : vector<8xf32> to vector<8x1xf32>
    %89 = tpu.reciprocal %88 {approx = true} : vector<8x1xf32> -> vector<8x1xf32>
    %90 = vector.broadcast %89 : vector<8x1xf32> to vector<8x8xf32>
    %91 = arith.mulf %86, %90 : vector<8x8xf32>
    %92 = arith.truncf %91 : vector<8x8xf32> to vector<8x8xbf16>
    %93 = vector.extract_strided_slice %55 {offsets = [0, 16], sizes = [8, 16], strides = [1, 1]} : vector<8x32xbf16> to vector<8x16xbf16>
    %cst_39 = arith.constant dense<0.000000e+00> : vector<8x16xf32>
    %94 = tpu.matmul %92, %93, %cst_39 {dimension_numbers = #tpu.dot_dimension_numbers<[1], [0], [0], [1], [0, 0, 1, 1], [], []>} : vector<8x8xbf16>, vector<8x16xbf16>, vector<8x16xf32> -> vector<8x16xf32>
    %c0_40 = arith.constant 0 : index
    %c16 = arith.constant 16 : index
    %95 = vector.load %arg16[%c0_40, %c16] : memref<8x32xf32, #tpu.memory_space<vmem>>, vector<8x16xf32>
    tpu.vector_store %arg16[%c0_40, %c16], %94 {strides = array<i32>} : memref<8x32xf32, #tpu.memory_space<vmem>>, vector<8x16xf32>,
    %c0_41 = arith.constant 0 : index
    %c0_42 = arith.constant 0 : index
    %96 = vector.load %arg16[%c0_41, %c0_42] : memref<8x32xf32, #tpu.memory_space<vmem>>, vector<8x32xf32>
    %97 = arith.truncf %96 : vector<8x32xf32> to vector<8x32xbf16>
    %c3 = arith.constant 3 : index
    %c0_43 = arith.constant 0 : index
    %c0_44 = arith.constant 0 : index
    %98 = vector.load %arg5[%c3, %c0_43, %c0_44] : memref<4x32x32xbf16, #tpu.memory_space<vmem>>, vector<1x32x32xbf16>
    %99 = vector.shape_cast %98 : vector<1x32x32xbf16> to vector<32x32xbf16>
    %cst_45 = arith.constant dense<0.000000e+00> : vector<8x32xf32>
    %100 = tpu.matmul %97, %99, %cst_45 {dimension_numbers = #tpu.dot_dimension_numbers<[1], [0], [0], [1], [0, 0, 1, 1], [], []>} : vector<8x32xbf16>, vector<32x32xbf16>, vector<8x32xf32> -> vector<8x32xf32>
    %101 = vector.extract_strided_slice %34 {offsets = [3, 0], sizes = [1, 32], strides = [1, 1]} : vector<4x32xf32> to vector<1x32xf32>
    %102 = vector.broadcast %101 : vector<1x32xf32> to vector<8x32xf32>
    %103 = arith.addf %100, %102 : vector<8x32xf32>
    %104 = arith.addf %3, %103 : vector<8x32xf32>
    %cst_46 = arith.constant dense<0.000000e+00> : vector<8xf32>
    %105 = vector.multi_reduction <add>, %104, %cst_46 [1] : vector<8x32xf32> to vector<8xf32>
    %106 = vector.shape_cast %105 : vector<8xf32> to vector<8x1xf32>
    %cst_47 = arith.constant 3.200000e+01 : f32
    %107 = vector.broadcast %cst_47 : f32 to vector<8x1xf32>
    %108 = arith.divf %106, %107 : vector<8x1xf32>
    %109 = vector.broadcast %108 : vector<8x1xf32> to vector<8x32xf32>
    %110 = arith.subf %104, %109 : vector<8x32xf32>
    %111 = arith.mulf %110, %110 : vector<8x32xf32>
    %cst_48 = arith.constant dense<0.000000e+00> : vector<8xf32>
    %112 = vector.multi_reduction <add>, %111, %cst_48 [1] : vector<8x32xf32> to vector<8xf32>
    %113 = vector.shape_cast %112 : vector<8xf32> to vector<8x1xf32>
    %cst_49 = arith.constant 3.200000e+01 : f32
    %114 = vector.broadcast %cst_49 : f32 to vector<8x1xf32>
    %115 = arith.divf %113, %114 : vector<8x1xf32>
    %116 = vector.broadcast %108 : vector<8x1xf32> to vector<8x32xf32>
    %117 = arith.subf %104, %116 : vector<8x32xf32>
    %cst_50 = arith.constant 9.99999997E-7 : f32
    %118 = vector.broadcast %cst_50 : f32 to vector<8x1xf32>
    %119 = arith.addf %115, %118 : vector<8x1xf32>
    %120 = math.rsqrt %119 : vector<8x1xf32>
    %121 = vector.broadcast %120 : vector<8x1xf32> to vector<8x32xf32>
    %122 = arith.mulf %117, %121 : vector<8x32xf32>
    %123 = vector.extract_strided_slice %0 {offsets = [1, 0], sizes = [1, 32], strides = [1, 1]} : vector<3x32xf32> to vector<1x32xf32>
    %124 = vector.broadcast %123 : vector<1x32xf32> to vector<8x32xf32>
    %125 = arith.mulf %122, %124 : vector<8x32xf32>
    %126 = vector.extract_strided_slice %1 {offsets = [1, 0], sizes = [1, 32], strides = [1, 1]} : vector<3x32xf32> to vector<1x32xf32>
    %127 = vector.broadcast %126 : vector<1x32xf32> to vector<8x32xf32>
    %128 = arith.addf %125, %127 : vector<8x32xf32>
    %129 = arith.truncf %128 : vector<8x32xf32> to vector<8x32xbf16>
    %c0_51 = arith.constant 0 : index
    %c0_52 = arith.constant 0 : index
    %c0_53 = arith.constant 0 : index
    %130 = vector.load %arg4[%c0_51, %c0_52, %c0_53] : memref<1x8x8xf32, #tpu.memory_space<vmem>>, vector<1x8x8xf32>
    %131 = vector.shape_cast %130 : vector<1x8x8xf32> to vector<8x8xf32>
    %c0_54 = arith.constant 0 : index
    %c0_55 = arith.constant 0 : index
    %132 = vector.load %arg8[%c0_54, %c0_55] : memref<4x32xf32, #tpu.memory_space<vmem>>, vector<4x32xf32>
    %c0_56 = arith.constant 0 : index
    %c0_57 = arith.constant 0 : index
    %c0_58 = arith.constant 0 : index
    %133 = vector.load %arg7[%c0_56, %c0_57, %c0_58] : memref<4x32x32xbf16, #tpu.memory_space<vmem>>, vector<1x32x32xbf16>
    %134 = vector.shape_cast %133 : vector<1x32x32xbf16> to vector<32x32xbf16>
    %cst_59 = arith.constant dense<0.000000e+00> : vector<8x32xf32>
    %135 = tpu.matmul %129, %134, %cst_59 {dimension_numbers = #tpu.dot_dimension_numbers<[1], [0], [0], [1], [0, 0, 1, 1], [], []>} : vector<8x32xbf16>, vector<32x32xbf16>, vector<8x32xf32> -> vector<8x32xf32>
    %136 = vector.extract_strided_slice %132 {offsets = [0, 0], sizes = [1, 32], strides = [1, 1]} : vector<4x32xf32> to vector<1x32xf32>
    %137 = vector.broadcast %136 : vector<1x32xf32> to vector<8x32xf32>
    %138 = arith.addf %135, %137 : vector<8x32xf32>
    %c1_60 = arith.constant 1 : index
    %c0_61 = arith.constant 0 : index
    %c0_62 = arith.constant 0 : index
    %139 = vector.load %arg7[%c1_60, %c0_61, %c0_62] : memref<4x32x32xbf16, #tpu.memory_space<vmem>>, vector<1x32x32xbf16>
    %140 = vector.shape_cast %139 : vector<1x32x32xbf16> to vector<32x32xbf16>
    %cst_63 = arith.constant dense<0.000000e+00> : vector<8x32xf32>
    %141 = tpu.matmul %6, %140, %cst_63 {dimension_numbers = #tpu.dot_dimension_numbers<[1], [0], [0], [1], [0, 0, 1, 1], [], []>} : vector<8x32xbf16>, vector<32x32xbf16>, vector<8x32xf32> -> vector<8x32xf32>
    %142 = vector.extract_strided_slice %132 {offsets = [1, 0], sizes = [1, 32], strides = [1, 1]} : vector<4x32xf32> to vector<1x32xf32>
    %143 = vector.broadcast %142 : vector<1x32xf32> to vector<8x32xf32>
    %144 = arith.addf %141, %143 : vector<8x32xf32>
    %c2_64 = arith.constant 2 : index
    %c0_65 = arith.constant 0 : index
    %c0_66 = arith.constant 0 : index
    %145 = vector.load %arg7[%c2_64, %c0_65, %c0_66] : memref<4x32x32xbf16, #tpu.memory_space<vmem>>, vector<1x32x32xbf16>
    %146 = vector.shape_cast %145 : vector<1x32x32xbf16> to vector<32x32xbf16>
    %cst_67 = arith.constant dense<0.000000e+00> : vector<8x32xf32>
    %147 = tpu.matmul %6, %146, %cst_67 {dimension_numbers = #tpu.dot_dimension_numbers<[1], [0], [0], [1], [0, 0, 1, 1], [], []>} : vector<8x32xbf16>, vector<32x32xbf16>, vector<8x32xf32> -> vector<8x32xf32>
    %148 = vector.extract_strided_slice %132 {offsets = [2, 0], sizes = [1, 32], strides = [1, 1]} : vector<4x32xf32> to vector<1x32xf32>
    %149 = vector.broadcast %148 : vector<1x32xf32> to vector<8x32xf32>
    %150 = arith.addf %147, %149 : vector<8x32xf32>
    %151 = arith.truncf %138 : vector<8x32xf32> to vector<8x32xbf16>
    %152 = arith.truncf %144 : vector<8x32xf32> to vector<8x32xbf16>
    %153 = arith.truncf %150 : vector<8x32xf32> to vector<8x32xbf16>
    %154 = vector.extract_strided_slice %151 {offsets = [0, 0], sizes = [8, 16], strides = [1, 1]} : vector<8x32xbf16> to vector<8x16xbf16>
    %155 = vector.extract_strided_slice %152 {offsets = [0, 0], sizes = [8, 16], strides = [1, 1]} : vector<8x32xbf16> to vector<8x16xbf16>
    %cst_68 = arith.constant dense<0.000000e+00> : vector<8x8xf32>
    %156 = tpu.matmul %154, %155, %cst_68 {dimension_numbers = #tpu.dot_dimension_numbers<[1], [1], [0], [0], [0, 0, 1, 0], [], []>} : vector<8x16xbf16>, vector<8x16xbf16>, vector<8x8xf32> -> vector<8x8xf32>
    %cst_69 = arith.constant 2.500000e-01 : f32
    %157 = vector.broadcast %cst_69 : f32 to vector<8x8xf32>
    %158 = arith.mulf %156, %157 : vector<8x8xf32>
    %159 = arith.addf %158, %131 : vector<8x8xf32>
    %cst_70 = arith.constant dense<0xFF800000> : vector<8xf32>
    %160 = vector.multi_reduction <maximumf>, %159, %cst_70 [1] : vector<8x8xf32> to vector<8xf32>
    %161 = vector.shape_cast %160 : vector<8xf32> to vector<8x1xf32>
    %162 = vector.broadcast %161 : vector<8x1xf32> to vector<8x8xf32>
    %163 = arith.subf %159, %162 : vector<8x8xf32>
    %164 = math.exp %163 : vector<8x8xf32>
    %cst_71 = arith.constant dense<0.000000e+00> : vector<8xf32>
    %165 = vector.multi_reduction <add>, %164, %cst_71 [1] : vector<8x8xf32> to vector<8xf32>
    %166 = vector.shape_cast %165 : vector<8xf32> to vector<8x1xf32>
    %167 = tpu.reciprocal %166 {approx = true} : vector<8x1xf32> -> vector<8x1xf32>
    %168 = vector.broadcast %167 : vector<8x1xf32> to vector<8x8xf32>
    %169 = arith.mulf %164, %168 : vector<8x8xf32>
    %170 = arith.truncf %169 : vector<8x8xf32> to vector<8x8xbf16>
    %171 = vector.extract_strided_slice %153 {offsets = [0, 0], sizes = [8, 16], strides = [1, 1]} : vector<8x32xbf16> to vector<8x16xbf16>
    %cst_72 = arith.constant dense<0.000000e+00> : vector<8x16xf32>
    %172 = tpu.matmul %170, %171, %cst_72 {dimension_numbers = #tpu.dot_dimension_numbers<[1], [0], [0], [1], [0, 0, 1, 1], [], []>} : vector<8x8xbf16>, vector<8x16xbf16>, vector<8x16xf32> -> vector<8x16xf32>
    %c0_73 = arith.constant 0 : index
    %c0_74 = arith.constant 0 : index
    %173 = vector.load %arg16[%c0_73, %c0_74] : memref<8x32xf32, #tpu.memory_space<vmem>>, vector<8x16xf32>
    tpu.vector_store %arg16[%c0_73, %c0_74], %172 {strides = array<i32>} : memref<8x32xf32, #tpu.memory_space<vmem>>, vector<8x16xf32>,
    %174 = vector.extract_strided_slice %151 {offsets = [0, 16], sizes = [8, 16], strides = [1, 1]} : vector<8x32xbf16> to vector<8x16xbf16>
    %175 = vector.extract_strided_slice %152 {offsets = [0, 16], sizes = [8, 16], strides = [1, 1]} : vector<8x32xbf16> to vector<8x16xbf16>
    %cst_75 = arith.constant dense<0.000000e+00> : vector<8x8xf32>
    %176 = tpu.matmul %174, %175, %cst_75 {dimension_numbers = #tpu.dot_dimension_numbers<[1], [1], [0], [0], [0, 0, 1, 0], [], []>} : vector<8x16xbf16>, vector<8x16xbf16>, vector<8x8xf32> -> vector<8x8xf32>
    %cst_76 = arith.constant 2.500000e-01 : f32
    %177 = vector.broadcast %cst_76 : f32 to vector<8x8xf32>
    %178 = arith.mulf %176, %177 : vector<8x8xf32>
    %179 = arith.addf %178, %131 : vector<8x8xf32>
    %cst_77 = arith.constant dense<0xFF800000> : vector<8xf32>
    %180 = vector.multi_reduction <maximumf>, %179, %cst_77 [1] : vector<8x8xf32> to vector<8xf32>
    %181 = vector.shape_cast %180 : vector<8xf32> to vector<8x1xf32>
    %182 = vector.broadcast %181 : vector<8x1xf32> to vector<8x8xf32>
    %183 = arith.subf %179, %182 : vector<8x8xf32>
    %184 = math.exp %183 : vector<8x8xf32>
    %cst_78 = arith.constant dense<0.000000e+00> : vector<8xf32>
    %185 = vector.multi_reduction <add>, %184, %cst_78 [1] : vector<8x8xf32> to vector<8xf32>
    %186 = vector.shape_cast %185 : vector<8xf32> to vector<8x1xf32>
    %187 = tpu.reciprocal %186 {approx = true} : vector<8x1xf32> -> vector<8x1xf32>
    %188 = vector.broadcast %187 : vector<8x1xf32> to vector<8x8xf32>
    %189 = arith.mulf %184, %188 : vector<8x8xf32>
    %190 = arith.truncf %189 : vector<8x8xf32> to vector<8x8xbf16>
    %191 = vector.extract_strided_slice %153 {offsets = [0, 16], sizes = [8, 16], strides = [1, 1]} : vector<8x32xbf16> to vector<8x16xbf16>
    %cst_79 = arith.constant dense<0.000000e+00> : vector<8x16xf32>
    %192 = tpu.matmul %190, %191, %cst_79 {dimension_numbers = #tpu.dot_dimension_numbers<[1], [0], [0], [1], [0, 0, 1, 1], [], []>} : vector<8x8xbf16>, vector<8x16xbf16>, vector<8x16xf32> -> vector<8x16xf32>
    %c0_80 = arith.constant 0 : index
    %c16_81 = arith.constant 16 : index
    %193 = vector.load %arg16[%c0_80, %c16_81] : memref<8x32xf32, #tpu.memory_space<vmem>>, vector<8x16xf32>
    tpu.vector_store %arg16[%c0_80, %c16_81], %192 {strides = array<i32>} : memref<8x32xf32, #tpu.memory_space<vmem>>, vector<8x16xf32>,
    %c0_82 = arith.constant 0 : index
    %c0_83 = arith.constant 0 : index
    %194 = vector.load %arg16[%c0_82, %c0_83] : memref<8x32xf32, #tpu.memory_space<vmem>>, vector<8x32xf32>
    %195 = arith.truncf %194 : vector<8x32xf32> to vector<8x32xbf16>
    %c3_84 = arith.constant 3 : index
    %c0_85 = arith.constant 0 : index
    %c0_86 = arith.constant 0 : index
    %196 = vector.load %arg7[%c3_84, %c0_85, %c0_86] : memref<4x32x32xbf16, #tpu.memory_space<vmem>>, vector<1x32x32xbf16>
    %197 = vector.shape_cast %196 : vector<1x32x32xbf16> to vector<32x32xbf16>
    %cst_87 = arith.constant dense<0.000000e+00> : vector<8x32xf32>
    %198 = tpu.matmul %195, %197, %cst_87 {dimension_numbers = #tpu.dot_dimension_numbers<[1], [0], [0], [1], [0, 0, 1, 1], [], []>} : vector<8x32xbf16>, vector<32x32xbf16>, vector<8x32xf32> -> vector<8x32xf32>
    %199 = vector.extract_strided_slice %132 {offsets = [3, 0], sizes = [1, 32], strides = [1, 1]} : vector<4x32xf32> to vector<1x32xf32>
    %200 = vector.broadcast %199 : vector<1x32xf32> to vector<8x32xf32>
    %201 = arith.addf %198, %200 : vector<8x32xf32>
    %202 = arith.addf %104, %201 : vector<8x32xf32>
    %cst_88 = arith.constant dense<0.000000e+00> : vector<8xf32>
    %203 = vector.multi_reduction <add>, %202, %cst_88 [1] : vector<8x32xf32> to vector<8xf32>
    %204 = vector.shape_cast %203 : vector<8xf32> to vector<8x1xf32>
    %cst_89 = arith.constant 3.200000e+01 : f32
    %205 = vector.broadcast %cst_89 : f32 to vector<8x1xf32>
    %206 = arith.divf %204, %205 : vector<8x1xf32>
    %207 = vector.broadcast %206 : vector<8x1xf32> to vector<8x32xf32>
    %208 = arith.subf %202, %207 : vector<8x32xf32>
    %209 = arith.mulf %208, %208 : vector<8x32xf32>
    %cst_90 = arith.constant dense<0.000000e+00> : vector<8xf32>
    %210 = vector.multi_reduction <add>, %209, %cst_90 [1] : vector<8x32xf32> to vector<8xf32>
    %211 = vector.shape_cast %210 : vector<8xf32> to vector<8x1xf32>
    %cst_91 = arith.constant 3.200000e+01 : f32
    %212 = vector.broadcast %cst_91 : f32 to vector<8x1xf32>
    %213 = arith.divf %211, %212 : vector<8x1xf32>
    %214 = vector.broadcast %206 : vector<8x1xf32> to vector<8x32xf32>
    %215 = arith.subf %202, %214 : vector<8x32xf32>
    %cst_92 = arith.constant 9.99999997E-7 : f32
    %216 = vector.broadcast %cst_92 : f32 to vector<8x1xf32>
    %217 = arith.addf %213, %216 : vector<8x1xf32>
    %218 = math.rsqrt %217 : vector<8x1xf32>
    %219 = vector.broadcast %218 : vector<8x1xf32> to vector<8x32xf32>
    %220 = arith.mulf %215, %219 : vector<8x32xf32>
    %221 = vector.extract_strided_slice %0 {offsets = [2, 0], sizes = [1, 32], strides = [1, 1]} : vector<3x32xf32> to vector<1x32xf32>
    %222 = vector.broadcast %221 : vector<1x32xf32> to vector<8x32xf32>
    %223 = arith.mulf %220, %222 : vector<8x32xf32>
    %224 = vector.extract_strided_slice %1 {offsets = [2, 0], sizes = [1, 32], strides = [1, 1]} : vector<3x32xf32> to vector<1x32xf32>
    %225 = vector.broadcast %224 : vector<1x32xf32> to vector<8x32xf32>
    %226 = arith.addf %223, %225 : vector<8x32xf32>
    %227 = arith.truncf %226 : vector<8x32xf32> to vector<8x32xbf16>
    %c0_93 = arith.constant 0 : index
    %c0_94 = arith.constant 0 : index
    %228 = vector.load %arg9[%c0_93, %c0_94] : memref<32x64xbf16, #tpu.memory_space<vmem>>, vector<32x64xbf16>
    %cst_95 = arith.constant dense<0.000000e+00> : vector<8x64xf32>
    %229 = tpu.matmul %227, %228, %cst_95 {dimension_numbers = #tpu.dot_dimension_numbers<[1], [0], [0], [1], [0, 0, 1, 1], [], []>} : vector<8x32xbf16>, vector<32x64xbf16>, vector<8x64xf32> -> vector<8x64xf32>
    %c0_96 = arith.constant 0 : index
    %c0_97 = arith.constant 0 : index
    %230 = vector.load %arg10[%c0_96, %c0_97] : memref<1x64xf32, #tpu.memory_space<vmem>>, vector<1x64xf32>
    %231 = vector.broadcast %230 : vector<1x64xf32> to vector<8x64xf32>
    %232 = arith.addf %229, %231 : vector<8x64xf32>
    %cst_98 = arith.constant 0.000000e+00 : f32
    %233 = vector.broadcast %cst_98 : f32 to vector<8x64xf32>
    %234 = arith.maximumf %232, %233 : vector<8x64xf32>
    %235 = arith.truncf %234 : vector<8x64xf32> to vector<8x64xbf16>
    %c0_99 = arith.constant 0 : index
    %c0_100 = arith.constant 0 : index
    %236 = vector.load %arg11[%c0_99, %c0_100] : memref<64x32xbf16, #tpu.memory_space<vmem>>, vector<64x32xbf16>
    %cst_101 = arith.constant dense<0.000000e+00> : vector<8x32xf32>
    %237 = tpu.matmul %235, %236, %cst_101 {dimension_numbers = #tpu.dot_dimension_numbers<[1], [0], [0], [1], [0, 0, 1, 1], [], []>} : vector<8x64xbf16>, vector<64x32xbf16>, vector<8x32xf32> -> vector<8x32xf32>
    %238 = arith.addf %202, %237 : vector<8x32xf32>
    %c0_102 = arith.constant 0 : index
    %c0_103 = arith.constant 0 : index
    %239 = vector.load %arg12[%c0_102, %c0_103] : memref<1x32xf32, #tpu.memory_space<vmem>>, vector<1x32xf32>
    %240 = vector.broadcast %239 : vector<1x32xf32> to vector<8x32xf32>
    %241 = arith.addf %238, %240 : vector<8x32xf32>
    %c0_104 = arith.constant 0 : index
    %c0_105 = arith.constant 0 : index
    %c0_106 = arith.constant 0 : index
    %242 = vector.load %arg15[%c0_104, %c0_105, %c0_106] : memref<1x8x32xf32, #tpu.memory_space<vmem>>, vector<1x8x32xf32>
    %243 = vector.shape_cast %242 : vector<1x8x32xf32> to vector<8x32xf32>
    %244 = vector.shape_cast %241 : vector<8x32xf32> to vector<1x8x32xf32>
    tpu.vector_store %arg15[%c0_104, %c0_105, %c0_106], %244 {strides = array<i32>} : memref<1x8x32xf32, #tpu.memory_space<vmem>>, vector<1x8x32xf32>,
    return
  }
  func.func @transform_0(%arg0: i32) -> (i32, i32, i32) {
    %c0_i32 = arith.constant 0 : i32
    %c0_i32_0 = arith.constant 0 : i32
    %c0_i32_1 = arith.constant 0 : i32
    return %arg0, %c0_i32, %c0_i32_0 : i32, i32, i32
  }
  func.func @transform_1(%arg0: i32) -> (i32, i32, i32) {
    %c0_i32 = arith.constant 0 : i32
    %c0_i32_0 = arith.constant 0 : i32
    %c0_i32_1 = arith.constant 0 : i32
    return %arg0, %c0_i32, %c0_i32_0 : i32, i32, i32
  }
  func.func @transform_2(%arg0: i32) -> (i32, i32, i32) {
    %c0_i32 = arith.constant 0 : i32
    %c0_i32_0 = arith.constant 0 : i32
    %c0_i32_1 = arith.constant 0 : i32
    return %arg0, %c0_i32, %c0_i32_0 : i32, i32, i32
  }
  func.func @transform_3(%arg0: i32) -> (i32, i32, i32) {
    %c0_i32 = arith.constant 0 : i32
    %c0_i32_0 = arith.constant 0 : i32
    %c0_i32_1 = arith.constant 0 : i32
    return %arg0, %c0_i32, %c0_i32_0 : i32, i32, i32
  }
  func.func @transform_4(%arg0: i32) -> (i32, i32, i32) {
    %c0_i32 = arith.constant 0 : i32
    %c0_i32_0 = arith.constant 0 : i32
    %c0_i32_1 = arith.constant 0 : i32
    %c0_i32_2 = arith.constant 0 : i32
    return %c0_i32, %c0_i32_0, %c0_i32_1 : i32, i32, i32
  }
  func.func @transform_5(%arg0: i32) -> (i32, i32) {
    %c0_i32 = arith.constant 0 : i32
    %c0_i32_0 = arith.constant 0 : i32
    %c0_i32_1 = arith.constant 0 : i32
    return %c0_i32, %c0_i32_0 : i32, i32
  }
  func.func @transform_6(%arg0: i32) -> (i32, i32, i32) {
    %c0_i32 = arith.constant 0 : i32
    %c0_i32_0 = arith.constant 0 : i32
    %c0_i32_1 = arith.constant 0 : i32
    %c0_i32_2 = arith.constant 0 : i32
    return %c0_i32, %c0_i32_0, %c0_i32_1 : i32, i32, i32
  }
  func.func @transform_7(%arg0: i32) -> (i32, i32) {
    %c0_i32 = arith.constant 0 : i32
    %c0_i32_0 = arith.constant 0 : i32
    %c0_i32_1 = arith.constant 0 : i32
    return %c0_i32, %c0_i32_0 : i32, i32
  }
  func.func @transform_8(%arg0: i32) -> (i32, i32) {
    %c0_i32 = arith.constant 0 : i32
    %c0_i32_0 = arith.constant 0 : i32
    %c0_i32_1 = arith.constant 0 : i32
    return %c0_i32, %c0_i32_0 : i32, i32
  }
  func.func @transform_9(%arg0: i32) -> (i32, i32) {
    %c0_i32 = arith.constant 0 : i32
    %c0_i32_0 = arith.constant 0 : i32
    %c0_i32_1 = arith.constant 0 : i32
    return %c0_i32, %c0_i32_0 : i32, i32
  }
  func.func @transform_10(%arg0: i32) -> (i32, i32) {
    %c0_i32 = arith.constant 0 : i32
    %c0_i32_0 = arith.constant 0 : i32
    %c0_i32_1 = arith.constant 0 : i32
    return %c0_i32, %c0_i32_0 : i32, i32
  }
  func.func @transform_11(%arg0: i32) -> (i32, i32) {
    %c0_i32 = arith.constant 0 : i32
    %c0_i32_0 = arith.constant 0 : i32
    %c0_i32_1 = arith.constant 0 : i32
    return %c0_i32, %c0_i32_0 : i32, i32
  }
  func.func @transform_12(%arg0: i32) -> (i32, i32) {
    %c0_i32 = arith.constant 0 : i32
    %c0_i32_0 = arith.constant 0 : i32
    %c0_i32_1 = arith.constant 0 : i32
    return %c0_i32, %c0_i32_0 : i32, i32
  }
  func.func @transform_13(%arg0: i32) -> (i32, i32) {
    %c0_i32 = arith.constant 0 : i32
    %c0_i32_0 = arith.constant 0 : i32
    %c0_i32_1 = arith.constant 0 : i32
    return %c0_i32, %c0_i32_0 : i32, i32
  }
  func.func @transform_14(%arg0: i32) -> (i32, i32, i32) {
    %c0_i32 = arith.constant 0 : i32
    %c0_i32_0 = arith.constant 0 : i32
    %c0_i32_1 = arith.constant 0 : i32
    return %arg0, %c0_i32, %c0_i32_0 : i32, i32, i32
  }
}

</mosaic_0001>

<llo_original>
// kernel: decoder_block_forward.1
$region0: #{decoder_block_forward.1}
  #allocation0 [shape = 'u32[]', space=smem, size = 0x4, offset = 0x4, fixed_abs, tag = 'smem constant byte address 0x4 - core index']
  #allocation1 [shape = 'u32[144,128]{1,0:T(1,128)}', space=vmem, size = 0x12000, scoped, tag = 'internal scratch']
  #allocation2 [shape = 'f32[8,32]{1,0:T(8,128)}', space=vmem, size = 0x1000, scoped, tag = 'scratch operand']
  %s0 = inlined_call_operand.hbm [shape: f32[2,8,32], index: 0, kind: input, shape index: {}]
  %s1 = inlined_call_operand.vmem [shape: f32[2,8,32], index: 1, kind: input, shape index: {}]
  %s2 = inlined_call_operand.vmem [shape: f32[2,8,8], index: 2, kind: input, shape index: {}]
  %s3 = inlined_call_operand.vmem [shape: f32[2,8,8], index: 3, kind: input, shape index: {}]
  %s4 = inlined_call_operand.vmem [shape: bf16[4,32,32], index: 4, kind: input, shape index: {}]
  %s5 = inlined_call_operand.hbm [shape: f32[4,32], index: 5, kind: input, shape index: {}]
  %s6 = inlined_call_operand.vmem [shape: bf16[4,32,32], index: 6, kind: input, shape index: {}]
  %s7 = inlined_call_operand.hbm [shape: f32[4,32], index: 7, kind: input, shape index: {}]
  %s8 = inlined_call_operand.hbm [shape: bf16[32,64], index: 8, kind: input, shape index: {}]
  %s9 = inlined_call_operand.hbm [shape: f32[1,64], index: 9, kind: input, shape index: {}]
  %s10 = inlined_call_operand.vmem [shape: bf16[64,32], index: 10, kind: input, shape index: {}]
  %s11 = inlined_call_operand.hbm [shape: f32[1,32], index: 11, kind: input, shape index: {}]
  %s12 = inlined_call_operand.hbm [shape: f32[3,32], index: 12, kind: input, shape index: {}]
  %s13 = inlined_call_operand.hbm [shape: f32[3,32], index: 13, kind: input, shape index: {}]
  %s14 = inlined_call_operand.hbm [shape: f32[2,8,32], index: 14, kind: output, shape index: {}]
  %s15 = sld [smem:[#allocation0]]
  $region121: #{decoder_block_forward.1} parent=0
    _
  %s17 = ssub.s32 1, %s15
  %s18 = scalar_select 0, %s17, %s15
  $region1: #{decoder_block_forward.1} parent=0
    #allocation3 [shape = 'u8[8192]{0}', space=vmem, size = 0x2000, scoped, tag = 'input window, operand 0']
    #allocation4 [shape = 's32[2]{0}', space=sflag, size = 0x8, scoped, tag = 'scoped memory for decoder_block_forward.1']
    #allocation5 [shape = 's32[2]{0}', space=sflag, size = 0x8, scoped, tag = 'scoped memory for decoder_block_forward.1']
    #allocation6 [shape = 'u8[2048]{0}', space=vmem, size = 0x800, scoped, tag = 'input window, operand 5, single buffered']
    #allocation7 [shape = 's32[1]{0}', space=sflag, size = 0x4, scoped, tag = 'scoped memory for decoder_block_forward.1']
    #allocation8 [shape = 'u8[2048]{0}', space=vmem, size = 0x800, scoped, tag = 'input window, operand 7, single buffered']
    #allocation9 [shape = 'u8[8192]{0}', space=vmem, size = 0x2000, scoped, tag = 'input window, operand 8, single buffered']
    #allocation10 [shape = 's32[1]{0}', space=sflag, size = 0x4, scoped, tag = 'scoped memory for decoder_block_forward.1']
    #allocation11 [shape = 'u8[512]{0}', space=vmem, size = 0x400, scoped, tag = 'input window, operand 9, single buffered']
    #allocation12 [shape = 'u8[512]{0}', space=vmem, size = 0x400, scoped, tag = 'input window, operand 11, single buffered']
    #allocation13 [shape = 's32[1]{0}', space=sflag, size = 0x4, scoped, tag = 'scoped memory for decoder_block_forward.1']
    #allocation14 [shape = 'u8[2048]{0}', space=vmem, size = 0x800, scoped, tag = 'input window, operand 12, single buffered']
    #allocation15 [shape = 'u8[2048]{0}', space=vmem, size = 0x800, scoped, tag = 'input window, operand 13, single buffered']
    #allocation16 [shape = 's32[1]{0}', space=sflag, size = 0x4, scoped, tag = 'scoped memory for decoder_block_forward.1']
    #allocation17 [shape = 'u8[8192]{0}', space=vmem, size = 0x2000, scoped, tag = 'output window, operand 0']
    %19 = vsyncpa [#allocation4], 0
    %s20 = scalar_lea.sflag [#allocation4], 1
    %21 = vsyncpa %s20, 0
    %22 = vsyncpa [#allocation7], 0
    %23 = vsyncpa [#allocation10], 0
    %24 = vsyncpa [#allocation13], 0
    %25 = vsyncpa [#allocation16], 0
    %26 = vsyncpa [#allocation5], 0
    %s27 = scalar_lea.sflag [#allocation5], 1
    %28 = vsyncpa %s27, 0
    loop: start=0, step=1, limit=4
    $region2: #{decoder_block_forward.1} parent=1 // loop_pre_header
      _
    $region3: #{decoder_block_forward.1} parent=1 // loop_header
      %s30 = sphi 0, %s34
      %p31 = scmp.ge.s32.totalorder %s30, 4
      %s40 = sphi 0, %s42
      %s43 = sphi 0, %s40
      %s44 = sphi 0, %s43
      %s60 = sphi 0, %s44
      %s66 = sphi 0, %s68
      %s69 = sphi 0, %s66
      %s70 = sphi 0, %s69
      %s86 = sphi 0, %s70
      %s92 = sphi 0, %s94
      %s95 = sphi 0, %s92
      %s96 = sphi 0, %s95
      %s112 = sphi 0, %s96
      %s118 = sphi 0, %s120
      %s121 = sphi 0, %s118
      %s122 = sphi 0, %s121
      %s138 = sphi 0, %s122
      %s142 = sphi 0, %s142
      %s144 = sphi 0, %s142
      %s145 = sphi 0, %s144
      %s159 = sphi 0, %s145
      %s163 = sphi 0, %s163
      %s165 = sphi 0, %s163
      %s166 = sphi 0, %s165
      %s180 = sphi 0, %s166
      %s184 = sphi 0, %s184
      %s186 = sphi 0, %s184
      %s187 = sphi 0, %s186
      %s201 = sphi 0, %s187
      %s205 = sphi 0, %s205
      %s207 = sphi 0, %s205
      %s208 = sphi 0, %s207
      %s222 = sphi 0, %s208
      %s226 = sphi 0, %s226
      %s228 = sphi 0, %s226
      %s229 = sphi 0, %s228
      %s243 = sphi 0, %s229
      %s247 = sphi 0, %s247
      %s249 = sphi 0, %s247
      %s250 = sphi 0, %s249
      %s264 = sphi 0, %s250
      %s268 = sphi 0, %s268
      %s270 = sphi 0, %s268
      %s271 = sphi 0, %s270
      %s285 = sphi 0, %s271
      %s289 = sphi 0, %s289
      %s291 = sphi 0, %s289
      %s292 = sphi 0, %s291
      %s306 = sphi 0, %s292
      %s310 = sphi 0, %s310
      %s312 = sphi 0, %s310
      %s313 = sphi 0, %s312
      %s327 = sphi 0, %s313
      %s331 = sphi 0, %s331
      %s333 = sphi 0, %s331
      %s334 = sphi 0, %s333
      %s348 = sphi 0, %s334
      %s354 = sphi 0, %s356
      %s357 = sphi 0, %s354
      %s358 = sphi 0, %s357
      %s374 = sphi 0, %s358
    $region4: #{decoder_block_forward.1} parent=1 // loop_header_branch
      %33 = sbr.rel (%p31) target = $region8
    $region5: #{decoder_block_forward.1} parent=1 // loop_body
      %s35 = ssub.s32 %s30, 1
      %s36 = ssub.s32 %s30, 2
      %s37 = sadd.s32 %s30, 1
      %s38 = ssub.s32 %s30, %s37
      %p39 = scmp.eq.s32.totalorder %s38, 0
      %s41 = sadd.s32 %s40, 1
      %s42 = scalar_select %p39, %s40, %s41
      %p45 = pneg %p39
      %p46 = scmp.eq.s32.totalorder %s30, 1
      %p47 = por %p45, %p46
      %p48 = scmp.ne.s32.totalorder %s40, %s43
      %p49 = scmp.eq.s32.totalorder %s30, 0
      %p50 = por %p48, %p49
      %p51 = scmp.ne.s32.totalorder %s40, %s43
      %p52 = scmp.eq.s32.totalorder %s35, 1
      %p53 = por %p51, %p52
      %p54 = scmp.ne.s32.totalorder %s43, %s44
      %p55 = scmp.eq.s32.totalorder %s35, 0
      %p56 = por %p54, %p55
      %p57 = scmp.ne.s32.totalorder %s43, %s44
      %p58 = scmp.eq.s32.totalorder %s36, 1
      %p59 = por %p57, %p58
      %p61 = scmp.ne.s32.totalorder %s44, %s60
      %p62 = scmp.eq.s32.totalorder %s36, 0
      %p63 = por %p61, %p62
      %s64 = ssub.s32 %s30, %s37
      %p65 = scmp.eq.s32.totalorder %s64, 0
      %s67 = sadd.s32 %s66, 1
      %s68 = scalar_select %p65, %s66, %s67
      %p71 = pneg %p65
      %p72 = scmp.eq.s32.totalorder %s30, 1
      %p73 = por %p71, %p72
      %p74 = scmp.ne.s32.totalorder %s66, %s69
      %p75 = scmp.eq.s32.totalorder %s30, 0
      %p76 = por %p74, %p75
      %p77 = scmp.ne.s32.totalorder %s66, %s69
      %p78 = scmp.eq.s32.totalorder %s35, 1
      %p79 = por %p77, %p78
      %p80 = scmp.ne.s32.totalorder %s69, %s70
      %p81 = scmp.eq.s32.totalorder %s35, 0
      %p82 = por %p80, %p81
      %p83 = scmp.ne.s32.totalorder %s69, %s70
      %p84 = scmp.eq.s32.totalorder %s36, 1
      %p85 = por %p83, %p84
      %p87 = scmp.ne.s32.totalorder %s70, %s86
      %p88 = scmp.eq.s32.totalorder %s36, 0
      %p89 = por %p87, %p88
      %s90 = ssub.s32 %s30, %s37
      %p91 = scmp.eq.s32.totalorder %s90, 0
      %s93 = sadd.s32 %s92, 1
      %s94 = scalar_select %p91, %s92, %s93
      %p97 = pneg %p91
      %p98 = scmp.eq.s32.totalorder %s30, 1
      %p99 = por %p97, %p98
      %p100 = scmp.ne.s32.totalorder %s92, %s95
      %p101 = scmp.eq.s32.totalorder %s30, 0
      %p102 = por %p100, %p101
      %p103 = scmp.ne.s32.totalorder %s92, %s95
      %p104 = scmp.eq.s32.totalorder %s35, 1
      %p105 = por %p103, %p104
      %p106 = scmp.ne.s32.totalorder %s95, %s96
      %p107 = scmp.eq.s32.totalorder %s35, 0
      %p108 = por %p106, %p107
      %p109 = scmp.ne.s32.totalorder %s95, %s96
      %p110 = scmp.eq.s32.totalorder %s36, 1
      %p111 = por %p109, %p110
      %p113 = scmp.ne.s32.totalorder %s96, %s112
      %p114 = scmp.eq.s32.totalorder %s36, 0
      %p115 = por %p113, %p114
      %s116 = ssub.s32 %s30, %s37
      %p117 = scmp.eq.s32.totalorder %s116, 0
      %s119 = sadd.s32 %s118, 1
      %s120 = scalar_select %p117, %s118, %s119
      %p123 = pneg %p117
      %p124 = scmp.eq.s32.totalorder %s30, 1
      %p125 = por %p123, %p124
      %p126 = scmp.ne.s32.totalorder %s118, %s121
      %p127 = scmp.eq.s32.totalorder %s30, 0
      %p128 = por %p126, %p127
      %p129 = scmp.ne.s32.totalorder %s118, %s121
      %p130 = scmp.eq.s32.totalorder %s35, 1
      %p131 = por %p129, %p130
      %p132 = scmp.ne.s32.totalorder %s121, %s122
      %p133 = scmp.eq.s32.totalorder %s35, 0
      %p134 = por %p132, %p133
      %p135 = scmp.ne.s32.totalorder %s121, %s122
      %p136 = scmp.eq.s32.totalorder %s36, 1
      %p137 = por %p135, %p136
      %p139 = scmp.ne.s32.totalorder %s122, %s138
      %p140 = scmp.eq.s32.totalorder %s36, 0
      %p141 = por %p139, %p140
      %s143 = sadd.s32 %s142, 1
      %p146 = scmp.eq.s32.totalorder %s30, 1
      %p147 = scmp.ne.s32.totalorder %s142, %s144
      %p148 = scmp.eq.s32.totalorder %s30, 0
      %p149 = por %p147, %p148
      %p150 = scmp.ne.s32.totalorder %s142, %s144
      %p151 = scmp.eq.s32.totalorder %s35, 1
      %p152 = por %p150, %p151
      %p153 = scmp.ne.s32.totalorder %s144, %s145
      %p154 = scmp.eq.s32.totalorder %s35, 0
      %p155 = por %p153, %p154
      %p156 = scmp.ne.s32.totalorder %s144, %s145
      %p157 = scmp.eq.s32.totalorder %s36, 1
      %p158 = por %p156, %p157
      %p160 = scmp.ne.s32.totalorder %s145, %s159
      %p161 = scmp.eq.s32.totalorder %s36, 0
      %p162 = por %p160, %p161
      %s164 = sadd.s32 %s163, 1
      %p167 = scmp.eq.s32.totalorder %s30, 1
      %p168 = scmp.ne.s32.totalorder %s163, %s165
      %p169 = scmp.eq.s32.totalorder %s30, 0
      %p170 = por %p168, %p169
      %p171 = scmp.ne.s32.totalorder %s163, %s165
      %p172 = scmp.eq.s32.totalorder %s35, 1
      %p173 = por %p171, %p172
      %p174 = scmp.ne.s32.totalorder %s165, %s166
      %p175 = scmp.eq.s32.totalorder %s35, 0
      %p176 = por %p174, %p175
      %p177 = scmp.ne.s32.totalorder %s165, %s166
      %p178 = scmp.eq.s32.totalorder %s36, 1
      %p179 = por %p177, %p178
      %p181 = scmp.ne.s32.totalorder %s166, %s180
      %p182 = scmp.eq.s32.totalorder %s36, 0
      %p183 = por %p181, %p182
      %s185 = sadd.s32 %s184, 1
      %p188 = scmp.eq.s32.totalorder %s30, 1
      %p189 = scmp.ne.s32.totalorder %s184, %s186
      %p190 = scmp.eq.s32.totalorder %s30, 0
      %p191 = por %p189, %p190
      %p192 = scmp.ne.s32.totalorder %s184, %s186
      %p193 = scmp.eq.s32.totalorder %s35, 1
      %p194 = por %p192, %p193
      %p195 = scmp.ne.s32.totalorder %s186, %s187
      %p196 = scmp.eq.s32.totalorder %s35, 0
      %p197 = por %p195, %p196
      %p198 = scmp.ne.s32.totalorder %s186, %s187
      %p199 = scmp.eq.s32.totalorder %s36, 1
      %p200 = por %p198, %p199
      %p202 = scmp.ne.s32.totalorder %s187, %s201
      %p203 = scmp.eq.s32.totalorder %s36, 0
      %p204 = por %p202, %p203
      %s206 = sadd.s32 %s205, 1
      %p209 = scmp.eq.s32.totalorder %s30, 1
      %p210 = scmp.ne.s32.totalorder %s205, %s207
      %p211 = scmp.eq.s32.totalorder %s30, 0
      %p212 = por %p210, %p211
      %p213 = scmp.ne.s32.totalorder %s205, %s207
      %p214 = scmp.eq.s32.totalorder %s35, 1
      %p215 = por %p213, %p214
      %p216 = scmp.ne.s32.totalorder %s207, %s208
      %p217 = scmp.eq.s32.totalorder %s35, 0
      %p218 = por %p216, %p217
      %p219 = scmp.ne.s32.totalorder %s207, %s208
      %p220 = scmp.eq.s32.totalorder %s36, 1
      %p221 = por %p219, %p220
      %p223 = scmp.ne.s32.totalorder %s208, %s222
      %p224 = scmp.eq.s32.totalorder %s36, 0
      %p225 = por %p223, %p224
      %s227 = sadd.s32 %s226, 1
      %p230 = scmp.eq.s32.totalorder %s30, 1
      %p231 = scmp.ne.s32.totalorder %s226, %s228
      %p232 = scmp.eq.s32.totalorder %s30, 0
      %p233 = por %p231, %p232
      %p234 = scmp.ne.s32.totalorder %s226, %s228
      %p235 = scmp.eq.s32.totalorder %s35, 1
      %p236 = por %p234, %p235
      %p237 = scmp.ne.s32.totalorder %s228, %s229
      %p238 = scmp.eq.s32.totalorder %s35, 0
      %p239 = por %p237, %p238
      %p240 = scmp.ne.s32.totalorder %s228, %s229
      %p241 = scmp.eq.s32.totalorder %s36, 1
      %p242 = por %p240, %p241
      %p244 = scmp.ne.s32.totalorder %s229, %s243
      %p245 = scmp.eq.s32.totalorder %s36, 0
      %p246 = por %p244, %p245
      %s248 = sadd.s32 %s247, 1
      %p251 = scmp.eq.s32.totalorder %s30, 1
      %p252 = scmp.ne.s32.totalorder %s247, %s249
      %p253 = scmp.eq.s32.totalorder %s30, 0
      %p254 = por %p252, %p253
      %p255 = scmp.ne.s32.totalorder %s247, %s249
      %p256 = scmp.eq.s32.totalorder %s35, 1
      %p257 = por %p255, %p256
      %p258 = scmp.ne.s32.totalorder %s249, %s250
      %p259 = scmp.eq.s32.totalorder %s35, 0
      %p260 = por %p258, %p259
      %p261 = scmp.ne.s32.totalorder %s249, %s250
      %p262 = scmp.eq.s32.totalorder %s36, 1
      %p263 = por %p261, %p262
      %p265 = scmp.ne.s32.totalorder %s250, %s264
      %p266 = scmp.eq.s32.totalorder %s36, 0
      %p267 = por %p265, %p266
      %s269 = sadd.s32 %s268, 1
      %p272 = scmp.eq.s32.totalorder %s30, 1
      %p273 = scmp.ne.s32.totalorder %s268, %s270
      %p274 = scmp.eq.s32.totalorder %s30, 0
      %p275 = por %p273, %p274
      %p276 = scmp.ne.s32.totalorder %s268, %s270
      %p277 = scmp.eq.s32.totalorder %s35, 1
      %p278 = por %p276, %p277
      %p279 = scmp.ne.s32.totalorder %s270, %s271
      %p280 = scmp.eq.s32.totalorder %s35, 0
      %p281 = por %p279, %p280
      %p282 = scmp.ne.s32.totalorder %s270, %s271
      %p283 = scmp.eq.s32.totalorder %s36, 1
      %p284 = por %p282, %p283
      %p286 = scmp.ne.s32.totalorder %s271, %s285
      %p287 = scmp.eq.s32.totalorder %s36, 0
      %p288 = por %p286, %p287
      %s290 = sadd.s32 %s289, 1
      %p293 = scmp.eq.s32.totalorder %s30, 1
      %p294 = scmp.ne.s32.totalorder %s289, %s291
      %p295 = scmp.eq.s32.totalorder %s30, 0
      %p296 = por %p294, %p295
      %p297 = scmp.ne.s32.totalorder %s289, %s291
      %p298 = scmp.eq.s32.totalorder %s35, 1
      %p299 = por %p297, %p298
      %p300 = scmp.ne.s32.totalorder %s291, %s292
      %p301 = scmp.eq.s32.totalorder %s35, 0
      %p302 = por %p300, %p301
      %p303 = scmp.ne.s32.totalorder %s291, %s292
      %p304 = scmp.eq.s32.totalorder %s36, 1
      %p305 = por %p303, %p304
      %p307 = scmp.ne.s32.totalorder %s292, %s306
      %p308 = scmp.eq.s32.totalorder %s36, 0
      %p309 = por %p307, %p308
      %s311 = sadd.s32 %s310, 1
      %p314 = scmp.eq.s32.totalorder %s30, 1
      %p315 = scmp.ne.s32.totalorder %s310, %s312
      %p316 = scmp.eq.s32.totalorder %s30, 0
      %p317 = por %p315, %p316
      %p318 = scmp.ne.s32.totalorder %s310, %s312
      %p319 = scmp.eq.s32.totalorder %s35, 1
      %p320 = por %p318, %p319
      %p321 = scmp.ne.s32.totalorder %s312, %s313
      %p322 = scmp.eq.s32.totalorder %s35, 0
      %p323 = por %p321, %p322
      %p324 = scmp.ne.s32.totalorder %s312, %s313
      %p325 = scmp.eq.s32.totalorder %s36, 1
      %p326 = por %p324, %p325
      %p328 = scmp.ne.s32.totalorder %s313, %s327
      %p329 = scmp.eq.s32.totalorder %s36, 0
      %p330 = por %p328, %p329
      %s332 = sadd.s32 %s331, 1
      %p335 = scmp.eq.s32.totalorder %s30, 1
      %p336 = scmp.ne.s32.totalorder %s331, %s333
      %p337 = scmp.eq.s32.totalorder %s30, 0
      %p338 = por %p336, %p337
      %p339 = scmp.ne.s32.totalorder %s331, %s333
      %p340 = scmp.eq.s32.totalorder %s35, 1
      %p341 = por %p339, %p340
      %p342 = scmp.ne.s32.totalorder %s333, %s334
      %p343 = scmp.eq.s32.totalorder %s35, 0
      %p344 = por %p342, %p343
      %p345 = scmp.ne.s32.totalorder %s333, %s334
      %p346 = scmp.eq.s32.totalorder %s36, 1
      %p347 = por %p345, %p346
      %p349 = scmp.ne.s32.totalorder %s334, %s348
      %p350 = scmp.eq.s32.totalorder %s36, 0
      %p351 = por %p349, %p350
      %s352 = ssub.s32 %s30, %s37
      %p353 = scmp.eq.s32.totalorder %s352, 0
      %s355 = sadd.s32 %s354, 1
      %s356 = scalar_select %p353, %s354, %s355
      %p359 = pneg %p353
      %p360 = scmp.eq.s32.totalorder %s30, 1
      %p361 = por %p359, %p360
      %p362 = scmp.ne.s32.totalorder %s354, %s357
      %p363 = scmp.eq.s32.totalorder %s30, 0
      %p364 = por %p362, %p363
      %p365 = scmp.ne.s32.totalorder %s354, %s357
      %p366 = scmp.eq.s32.totalorder %s35, 1
      %p367 = por %p365, %p366
      %p368 = scmp.ne.s32.totalorder %s357, %s358
      %p369 = scmp.eq.s32.totalorder %s35, 0
      %p370 = por %p368, %p369
      %p371 = scmp.ne.s32.totalorder %s357, %s358
      %p372 = scmp.eq.s32.totalorder %s36, 1
      %p373 = por %p371, %p372
      %p375 = scmp.ne.s32.totalorder %s358, %s374
      %p376 = scmp.eq.s32.totalorder %s36, 0
      %p377 = por %p375, %p376
      %p378 = scmp.le.s32.totalorder 1, %s30
      %p379 = scmp.lt.s32.totalorder %s30, 3
      %p380 = pnand %p378, %p379
      %p381 = pneg %p380
      // Predicated region
      $region9: #{decoder_block_forward.1} parent=5 // pred_check
        _
      $region10: #{decoder_block_forward.1} parent=5 // pred_check_branch
        %383 = sbr.rel (%p380) target = $region12
      $region11: #{decoder_block_forward.1} parent=5 // pred_region
        %s384 = ssub.s32 %s30, 1
        // Predicated region
        $region13: #{decoder_block_forward.1} parent=11 // pred_check
          %p385 = pneg %p155
        $region14: #{decoder_block_forward.1} parent=11 // pred_check_branch
          %387 = sbr.rel (%p385) target = $region16
        $region15: #{decoder_block_forward.1} parent=11 // pred_region
          _
        $region16: #{decoder_block_forward.1} parent=11 // pred_fallthru
          _
        // Predicated region
        $region17: #{decoder_block_forward.1} parent=11 // pred_check
          %p388 = pneg %p176
        $region18: #{decoder_block_forward.1} parent=11 // pred_check_branch
          %390 = sbr.rel (%p388) target = $region20
        $region19: #{decoder_block_forward.1} parent=11 // pred_region
          %s392 = ssub.s32 64, 64
          %393 = vsyncadd [#allocation7], %s392
          %s395 = sshll.u32 [#allocation6], 4
          %s396 = int_to_ptr.vmem [resolvable:$true] %s395
          %398 = dma.hbm_to_vmem [thread:$0]  %s5, 64, %s396, [#allocation7]
        $region20: #{decoder_block_forward.1} parent=11 // pred_fallthru
          _
        // Predicated region
        $region21: #{decoder_block_forward.1} parent=11 // pred_check
          %p399 = pneg %p197
        $region22: #{decoder_block_forward.1} parent=11 // pred_check_branch
          %401 = sbr.rel (%p399) target = $region24
        $region23: #{decoder_block_forward.1} parent=11 // pred_region
          _
        $region24: #{decoder_block_forward.1} parent=11 // pred_fallthru
          _
        // Predicated region
        $region25: #{decoder_block_forward.1} parent=11 // pred_check
          %p402 = pneg %p218
        $region26: #{decoder_block_forward.1} parent=11 // pred_check_branch
          %404 = sbr.rel (%p402) target = $region28
        $region27: #{decoder_block_forward.1} parent=11 // pred_region
          %s406 = ssub.s32 64, 64
          %407 = vsyncadd [#allocation7], %s406
          %s409 = sshll.u32 [#allocation8], 4
          %s410 = int_to_ptr.vmem [resolvable:$true] %s409
          %412 = dma.hbm_to_vmem [thread:$0]  %s7, 64, %s410, [#allocation7]
        $region28: #{decoder_block_forward.1} parent=11 // pred_fallthru
          _
        // Predicated region
        $region29: #{decoder_block_forward.1} parent=11 // pred_check
          %p413 = pneg %p239
        $region30: #{decoder_block_forward.1} parent=11 // pred_check_branch
          %415 = sbr.rel (%p413) target = $region32
        $region31: #{decoder_block_forward.1} parent=11 // pred_region
          %s417 = ssub.s32 256, 256
          %418 = vsyncadd [#allocation10], %s417
          %s419 = sshll.u32 [#allocation9], 4
          %s420 = int_to_ptr.vmem [resolvable:$true] %s419
          %425 = dma.hbm_to_vmem [thread:$0]  %s8, 256, %s420, [#allocation10], 64, 64, 4
        $region32: #{decoder_block_forward.1} parent=11 // pred_fallthru
          _
        // Predicated region
        $region33: #{decoder_block_forward.1} parent=11 // pred_check
          %p426 = pneg %p260
        $region34: #{decoder_block_forward.1} parent=11 // pred_check_branch
          %428 = sbr.rel (%p426) target = $region36
        $region35: #{decoder_block_forward.1} parent=11 // pred_region
          %s430 = ssub.s32 16, 16
          %431 = vsyncadd [#allocation10], %s430
          %s433 = sshll.u32 [#allocation11], 4
          %s434 = int_to_ptr.vmem [resolvable:$true] %s433
          %436 = dma.hbm_to_vmem [thread:$0]  %s9, 16, %s434, [#allocation10]
        $region36: #{decoder_block_forward.1} parent=11 // pred_fallthru
          _
        // Predicated region
        $region37: #{decoder_block_forward.1} parent=11 // pred_check
          %p437 = pneg %p281
        $region38: #{decoder_block_forward.1} parent=11 // pred_check_branch
          %439 = sbr.rel (%p437) target = $region40
        $region39: #{decoder_block_forward.1} parent=11 // pred_region
          _
        $region40: #{decoder_block_forward.1} parent=11 // pred_fallthru
          _
        // Predicated region
        $region41: #{decoder_block_forward.1} parent=11 // pred_check
          %p440 = pneg %p302
        $region42: #{decoder_block_forward.1} parent=11 // pred_check_branch
          %442 = sbr.rel (%p440) target = $region44
        $region43: #{decoder_block_forward.1} parent=11 // pred_region
          %s444 = ssub.s32 16, 16
          %445 = vsyncadd [#allocation13], %s444
          %s447 = sshll.u32 [#allocation12], 4
          %s448 = int_to_ptr.vmem [resolvable:$true] %s447
          %450 = dma.hbm_to_vmem [thread:$0]  %s11, 16, %s448, [#allocation13]
        $region44: #{decoder_block_forward.1} parent=11 // pred_fallthru
          _
        // Predicated region
        $region45: #{decoder_block_forward.1} parent=11 // pred_check
          %p451 = pneg %p323
        $region46: #{decoder_block_forward.1} parent=11 // pred_check_branch
          %453 = sbr.rel (%p451) target = $region48
        $region47: #{decoder_block_forward.1} parent=11 // pred_region
          %s455 = ssub.s32 64, 64
          %456 = vsyncadd [#allocation13], %s455
          %s458 = sshll.u32 [#allocation14], 4
          %s459 = int_to_ptr.vmem [resolvable:$true] %s458
          %461 = dma.hbm_to_vmem [thread:$0]  %s12, 64, %s459, [#allocation13]
        $region48: #{decoder_block_forward.1} parent=11 // pred_fallthru
          _
        // Predicated region
        $region49: #{decoder_block_forward.1} parent=11 // pred_check
          %p462 = pneg %p344
        $region50: #{decoder_block_forward.1} parent=11 // pred_check_branch
          %464 = sbr.rel (%p462) target = $region52
        $region51: #{decoder_block_forward.1} parent=11 // pred_region
          %s466 = ssub.s32 64, 64
          %467 = vsyncadd [#allocation16], %s466
          %s469 = sshll.u32 [#allocation15], 4
          %s470 = int_to_ptr.vmem [resolvable:$true] %s469
          %472 = dma.hbm_to_vmem [thread:$0]  %s13, 64, %s470, [#allocation16]
        $region52: #{decoder_block_forward.1} parent=11 // pred_fallthru
          _
      $region12: #{decoder_block_forward.1} parent=5 // pred_fallthru
        _
      %p473 = scmp.lt.s32.totalorder %s30, 2
      // Predicated region
      $region53: #{decoder_block_forward.1} parent=5 // pred_check
        %p474 = pneg %p473
      $region54: #{decoder_block_forward.1} parent=5 // pred_check_branch
        %476 = sbr.rel (%p474) target = $region56
      $region55: #{decoder_block_forward.1} parent=5 // pred_region
        // Predicated region
        $region57: #{decoder_block_forward.1} parent=55 // pred_check
          %p477 = pneg %p50
        $region58: #{decoder_block_forward.1} parent=55 // pred_check_branch
          %479 = sbr.rel (%p477) target = $region60
        $region59: #{decoder_block_forward.1} parent=55 // pred_region
          %s480 = sand.u32 %s40, 1
          %s481 = scalar_lea.sflag [#allocation4], %s480
          %s482 = sand.u32 %s40, 1
          %s483 = smul.addr %s482, 8
          %s484 = scalar_lea.vmem [#allocation3], %s483
          %s486 = ssub.s32 128, 128
          %487 = vsyncadd %s481, %s486
          %s488 = smul.addr %s30, 128
          %s489 = scalar_lea.hbm %s0, %s488
          %s491 = sshll.u32 %s484, 4
          %s492 = int_to_ptr.vmem [resolvable:$true] %s491
          %494 = dma.hbm_to_vmem [thread:$0]  %s489, 128, %s492, %s481
        $region60: #{decoder_block_forward.1} parent=55 // pred_fallthru
          _
        // Predicated region
        $region61: #{decoder_block_forward.1} parent=55 // pred_check
          %p495 = pneg %p76
        $region62: #{decoder_block_forward.1} parent=55 // pred_check_branch
          %497 = sbr.rel (%p495) target = $region64
        $region63: #{decoder_block_forward.1} parent=55 // pred_region
          %p498 = scmp.lt.s32.totalorder %s30, 1
          %s499 = scalar_select %p498, %s30, 1
          %s500 = smul.addr %s499, 8
          %s501 = scalar_lea.vmem %s1, %s500
        $region64: #{decoder_block_forward.1} parent=55 // pred_fallthru
          _
        // Predicated region
        $region65: #{decoder_block_forward.1} parent=55 // pred_check
          %p502 = pneg %p102
        $region66: #{decoder_block_forward.1} parent=55 // pred_check_branch
          %504 = sbr.rel (%p502) target = $region68
        $region67: #{decoder_block_forward.1} parent=55 // pred_region
          %p505 = scmp.lt.s32.totalorder %s30, 1
          %s506 = scalar_select %p505, %s30, 1
          %s507 = smul.addr %s506, 8
          %s508 = scalar_lea.vmem %s2, %s507
        $region68: #{decoder_block_forward.1} parent=55 // pred_fallthru
          _
        // Predicated region
        $region69: #{decoder_block_forward.1} parent=55 // pred_check
          %p509 = pneg %p128
        $region70: #{decoder_block_forward.1} parent=55 // pred_check_branch
          %511 = sbr.rel (%p509) target = $region72
        $region71: #{decoder_block_forward.1} parent=55 // pred_region
          %p512 = scmp.lt.s32.totalorder %s30, 1
          %s513 = scalar_select %p512, %s30, 1
          %s514 = smul.addr %s513, 8
          %s515 = scalar_lea.vmem %s3, %s514
        $region72: #{decoder_block_forward.1} parent=55 // pred_fallthru
          _
      $region56: #{decoder_block_forward.1} parent=5 // pred_fallthru
        _
      %p516 = scmp.le.s32.totalorder 1, %s30
      %p517 = scmp.lt.s32.totalorder %s30, 3
      %p518 = pnand %p516, %p517
      %p519 = pneg %p518
      // Predicated region
      $region73: #{decoder_block_forward.1} parent=5 // pred_check
        _
      $region74: #{decoder_block_forward.1} parent=5 // pred_check_branch
        %521 = sbr.rel (%p518) target = $region76
      $region75: #{decoder_block_forward.1} parent=5 // pred_region
        %s522 = ssub.s32 %s30, 1
        %s523 = sand.u32 %s43, 1
        %s524 = scalar_lea.sflag [#allocation4], %s523
        %s525 = sand.u32 %s43, 1
        %s526 = smul.addr %s525, 8
        %s527 = scalar_lea.vmem [#allocation3], %s526
        // Predicated region
        $region77: #{decoder_block_forward.1} parent=75 // pred_check
          %p528 = pneg %p56
        $region78: #{decoder_block_forward.1} parent=75 // pred_check_branch
          %530 = sbr.rel (%p528) target = $region80
        $region79: #{decoder_block_forward.1} parent=75 // pred_region
          %531 = dma.done %s524, 128
        $region80: #{decoder_block_forward.1} parent=75 // pred_fallthru
          _
        // Predicated region
        $region81: #{decoder_block_forward.1} parent=75 // pred_check
          %p532 = pneg %p176
        $region82: #{decoder_block_forward.1} parent=75 // pred_check_branch
          %534 = sbr.rel (%p532) target = $region84
        $region83: #{decoder_block_forward.1} parent=75 // pred_region
          %535 = dma.done [#allocation7], 64
        $region84: #{decoder_block_forward.1} parent=75 // pred_fallthru
          _
        // Predicated region
        $region85: #{decoder_block_forward.1} parent=75 // pred_check
          %p536 = pneg %p218
        $region86: #{decoder_block_forward.1} parent=75 // pred_check_branch
          %538 = sbr.rel (%p536) target = $region88
        $region87: #{decoder_block_forward.1} parent=75 // pred_region
          %539 = dma.done [#allocation7], 64
        $region88: #{decoder_block_forward.1} parent=75 // pred_fallthru
          _
        // Predicated region
        $region89: #{decoder_block_forward.1} parent=75 // pred_check
          %p540 = pneg %p239
        $region90: #{decoder_block_forward.1} parent=75 // pred_check_branch
          %542 = sbr.rel (%p540) target = $region92
        $region91: #{decoder_block_forward.1} parent=75 // pred_region
          %543 = dma.done [#allocation10], 256
        $region92: #{decoder_block_forward.1} parent=75 // pred_fallthru
          _
        // Predicated region
        $region93: #{decoder_block_forward.1} parent=75 // pred_check
          %p544 = pneg %p260
        $region94: #{decoder_block_forward.1} parent=75 // pred_check_branch
          %546 = sbr.rel (%p544) target = $region96
        $region95: #{decoder_block_forward.1} parent=75 // pred_region
          %547 = dma.done [#allocation10], 16
        $region96: #{decoder_block_forward.1} parent=75 // pred_fallthru
          _
        // Predicated region
        $region97: #{decoder_block_forward.1} parent=75 // pred_check
          %p548 = pneg %p302
        $region98: #{decoder_block_forward.1} parent=75 // pred_check_branch
          %550 = sbr.rel (%p548) target = $region100
        $region99: #{decoder_block_forward.1} parent=75 // pred_region
          %551 = dma.done [#allocation13], 16
        $region100: #{decoder_block_forward.1} parent=75 // pred_fallthru
          _
        // Predicated region
        $region101: #{decoder_block_forward.1} parent=75 // pred_check
          %p552 = pneg %p323
        $region102: #{decoder_block_forward.1} parent=75 // pred_check_branch
          %554 = sbr.rel (%p552) target = $region104
        $region103: #{decoder_block_forward.1} parent=75 // pred_region
          %555 = dma.done [#allocation13], 64
        $region104: #{decoder_block_forward.1} parent=75 // pred_fallthru
          _
        // Predicated region
        $region105: #{decoder_block_forward.1} parent=75 // pred_check
          %p556 = pneg %p344
        $region106: #{decoder_block_forward.1} parent=75 // pred_check_branch
          %558 = sbr.rel (%p556) target = $region108
        $region107: #{decoder_block_forward.1} parent=75 // pred_region
          %559 = dma.done [#allocation16], 64
        $region108: #{decoder_block_forward.1} parent=75 // pred_fallthru
          _
        %s560 = sand.u32 %s43, 1
        %s561 = scalar_lea.sflag [#allocation4], %s560
        %s562 = sand.u32 %s43, 1
        %s563 = smul.addr %s562, 8
        %s564 = scalar_lea.vmem [#allocation3], %s563
        %p565 = pneg %p56
        %p566 = pneg %p53
        %p567 = scmp.lt.s32.totalorder %s35, 1
        %s568 = scalar_select %p567, %s35, 1
        %s569 = smul.addr %s568, 8
        %s570 = scalar_lea.vmem %s1, %s569
        %p571 = pneg %p82
        %p572 = pneg %p79
        %p573 = scmp.lt.s32.totalorder %s35, 1
        %s574 = scalar_select %p573, %s35, 1
        %s575 = smul.addr %s574, 8
        %s576 = scalar_lea.vmem %s2, %s575
        %p577 = pneg %p108
        %p578 = pneg %p105
        %p579 = scmp.lt.s32.totalorder %s35, 1
        %s580 = scalar_select %p579, %s35, 1
        %s581 = smul.addr %s580, 8
        %s582 = scalar_lea.vmem %s3, %s581
        %p583 = pneg %p134
        %p584 = pneg %p131
        %p585 = pneg %p155
        %p586 = pneg %p152
        %p587 = pneg %p176
        %p588 = pneg %p173
        %p589 = pneg %p197
        %p590 = pneg %p194
        %p591 = pneg %p218
        %p592 = pneg %p215
        %p593 = pneg %p239
        %p594 = pneg %p236
        %p595 = pneg %p260
        %p596 = pneg %p257
        %p597 = pneg %p281
        %p598 = pneg %p278
        %p599 = pneg %p302
        %p600 = pneg %p299
        %p601 = pneg %p323
        %p602 = pneg %p320
        %p603 = pneg %p344
        %p604 = pneg %p341
        %p605 = pneg %p370
        %p606 = pneg %p367
        %s607 = sand.u32 %s357, 1
        %s608 = scalar_lea.sflag [#allocation5], %s607
        %s609 = sand.u32 %s357, 1
        %s610 = smul.addr %s609, 8
        %s611 = scalar_lea.vmem [#allocation17], %s610
        %p612 = scmp.lt.s32.totalorder %s35, 1
        %s613 = scalar_select %p612, %s35, 1
        %s614 = smul.addr %s613, 8
        %s615 = scalar_lea.vmem %s1, %s614
        %p616 = scmp.lt.s32.totalorder %s35, 1
        %s617 = scalar_select %p616, %s35, 1
        %s618 = smul.addr %s617, 8
        %s619 = scalar_lea.vmem %s2, %s618
        %p620 = scmp.lt.s32.totalorder %s35, 1
        %s621 = scalar_select %p620, %s35, 1
        %s622 = smul.addr %s621, 8
        %s623 = scalar_lea.vmem %s3, %s622
        %v625 = vld [vmem:[#allocation14] sm:$0x7]
        %v626 = vld [vmem:[#allocation15] sm:$0x7]
        %v627 = vld [vmem:[%s527] sm:$0xff]
        %v628 = vld [vmem:[%s615] sm:$0xff]
        %v629 = vpack.c.bf16 %v628, %v628
        %vm630 = vcmask 261120
        %v631 = vsel %vm630, %v627, 0.0
        %632 = vadd.xlane.f32.xlu0 %v631
        %v633 = vpop.xlane.xlu0 %632
        %v634 = vrcp.pop 32.0
        %v635 = vmul.f32 %v633, %v634
        %v636 = vsub.f32 %v627, %v635
        %v637 = vmul.f32 %v636, %v636
        %v638 = vsel %vm630, %v637, 0.0
        %639 = vadd.xlane.f32.xlu0 %v638
        %v640 = vpop.xlane.xlu0 %639
        %v641 = vmul.f32 %v640, %v634
        %v642 = vadd.f32 %v641, 1e-06
        %v643 = vrsqrt.pop %v642
        %v644 = vmul.f32 %v636, %v643
        %v645 = vlaneseq
        %v646 = vshrl.u32 %v645, 7
        %v647 = vsub.s32 0, %v646
        %v648 = vrot.slane %v625, %v647
        %v649 = vmul.f32 %v644, %v648
        %v650 = vlaneseq
        %v651 = vshrl.u32 %v650, 7
        %v652 = vsub.s32 0, %v651
        %v653 = vrot.slane %v626, %v652
        %v654 = vadd.f32 %v649, %v653
        %v655 = vpack.c.bf16 %v654, %v654
        %v656 = vld [vmem:[%s619] sm:$0xff]
        %v657 = vld [vmem:[#allocation6] sm:$0xf]
        %v658 = vld [vmem:[%s4] sm:$0xf]
        %v659 = vld [vmem:[%s4 + $0x4] sm:$0xf]
        %v660 = vld [vmem:[%s4 + $0x8] sm:$0xf]
        %v661 = vld [vmem:[%s4 + $0xc] sm:$0xf]
        %v662 = vlaneseq
        %v663 = vshrl.u32 %v662, 7
        %v664 = vsub.s32 0, %v663
        %v665 = vrot.slane %v657, %v664
        %v670 = vunpack.c.l.b16 %v658
        %v671 = vunpack.c.l.b16 %v659
        %v672 = vunpack.c.l.b16 %v660
        %v673 = vunpack.c.l.b16 %v661
        %v674 = vpack.c.b16 %v671, %v670
        %v675 = vpack.c.b16 %v673, %v672
        %v679 = vsel %vm630, %v655, 0
        %681 = vmatprep.subr.bf16.mxu0 0
        %682 = vmatpush1.bf16.msra.mxu0 %v674
        %683 = vmatprep.subr.bf16.mxu0 0
        %684 = vmatpush1.bf16.msra.mxu0 %v675
        %685 = vmatprep.subr.bf16.mxu0 0
        %686 = vmatpush1.bf16.msra.mxu0 0
        %687 = vmatprep.subr.bf16.mxu0 0
        %688 = vmatpush1.bf16.msra.mxu0 0
        %689 = vmatprep.subr.bf16.mxu0 0
        %690 = vmatpush1.bf16.msra.mxu0 0
        %691 = vmatprep.subr.bf16.mxu0 0
        %692 = vmatpush1.bf16.msra.mxu0 0
        %693 = vmatprep.subr.bf16.mxu0 0
        %694 = vmatpush1.bf16.msra.mxu0 0
        %695 = vmatprep.subr.bf16.mxu0 0
        %696 = vmatpush1.bf16.msra.mxu0 0
        %697 = vmatprep.subr.bf16.mxu0 0
        %698 = vmatpush1.bf16.msra.mxu0 0
        %699 = vmatprep.subr.bf16.mxu0 0
        %700 = vmatpush1.bf16.msra.mxu0 0
        %701 = vmatprep.subr.bf16.mxu0 0
        %702 = vmatpush1.bf16.msra.mxu0 0
        %703 = vmatprep.subr.bf16.mxu0 0
        %704 = vmatpush1.bf16.msra.mxu0 0
        %705 = vmatprep.subr.bf16.mxu0 0
        %706 = vmatpush1.bf16.msra.mxu0 0
        %707 = vmatprep.subr.bf16.mxu0 0
        %708 = vmatpush1.bf16.msra.mxu0 0
        %709 = vmatprep.subr.bf16.mxu0 0
        %710 = vmatpush1.bf16.msra.mxu0 0
        %711 = vmatprep.subr.bf16.mxu0 0
        %712 = vmatpush1.bf16.msra.mxu0 0
        %713 = vmatprep.mubr.bf16.mxu0 0
        %714 = vmatmul.mubr.bf16.gmra.mrb[0].mxu0 %v679
        %v715 = vpop.f32.mrb[0].mxu0
        %v716 = vadd.f32 %v665, %v715
        %v717 = vpop.f32.mrb[0].mxu0
        %v718 = vpop.f32.mrb[0].mxu0
        %v719 = vpop.f32.mrb[0].mxu0
        %720 = vdwg.mxu0
        %s721 = scalar_lea.vmem %s4, 16
        %v722 = vld [vmem:[%s721] sm:$0xf]
        %v723 = vld [vmem:[%s721 + $0x4] sm:$0xf]
        %v724 = vld [vmem:[%s721 + $0x8] sm:$0xf]
        %v725 = vld [vmem:[%s721 + $0xc] sm:$0xf]
        %v726 = vlaneseq
        %v727 = vshrl.u32 %v726, 7
        %v728 = vsub.s32 1, %v727
        %v729 = vrot.slane %v657, %v728
        %v734 = vunpack.c.l.b16 %v722
        %v735 = vunpack.c.l.b16 %v723
        %v736 = vunpack.c.l.b16 %v724
        %v737 = vunpack.c.l.b16 %v725
        %v738 = vpack.c.b16 %v735, %v734
        %v739 = vpack.c.b16 %v737, %v736
        %742 = vmatprep.subr.bf16.mxu0 0
        %743 = vmatpush1.bf16.msra.mxu0 %v738
        %744 = vmatprep.subr.bf16.mxu0 0
        %745 = vmatpush1.bf16.msra.mxu0 %v739
        %746 = vmatprep.subr.bf16.mxu0 0
        %747 = vmatpush1.bf16.msra.mxu0 0
        %748 = vmatprep.subr.bf16.mxu0 0
        %749 = vmatpush1.bf16.msra.mxu0 0
        %750 = vmatprep.subr.bf16.mxu0 0
        %751 = vmatpush1.bf16.msra.mxu0 0
        %752 = vmatprep.subr.bf16.mxu0 0
        %753 = vmatpush1.bf16.msra.mxu0 0
        %754 = vmatprep.subr.bf16.mxu0 0
        %755 = vmatpush1.bf16.msra.mxu0 0
        %756 = vmatprep.subr.bf16.mxu0 0
        %757 = vmatpush1.bf16.msra.mxu0 0
        %758 = vmatprep.subr.bf16.mxu0 0
        %759 = vmatpush1.bf16.msra.mxu0 0
        %760 = vmatprep.subr.bf16.mxu0 0
        %761 = vmatpush1.bf16.msra.mxu0 0
        %762 = vmatprep.subr.bf16.mxu0 0
        %763 = vmatpush1.bf16.msra.mxu0 0
        %764 = vmatprep.subr.bf16.mxu0 0
        %765 = vmatpush1.bf16.msra.mxu0 0
        %766 = vmatprep.subr.bf16.mxu0 0
        %767 = vmatpush1.bf16.msra.mxu0 0
        %768 = vmatprep.subr.bf16.mxu0 0
        %769 = vmatpush1.bf16.msra.mxu0 0
        %770 = vmatprep.subr.bf16.mxu0 0
        %771 = vmatpush1.bf16.msra.mxu0 0
        %772 = vmatprep.subr.bf16.mxu0 0
        %773 = vmatpush1.bf16.msra.mxu0 0
        %774 = vmatprep.mubr.bf16.mxu0 0
        %775 = vmatmul.mubr.bf16.gmra.mrb[0].mxu0 %v679
        %v776 = vpop.f32.mrb[0].mxu0
        %v777 = vadd.f32 %v729, %v776
        %v778 = vpop.f32.mrb[0].mxu0
        %v779 = vpop.f32.mrb[0].mxu0
        %v780 = vpop.f32.mrb[0].mxu0
        %781 = vdwg.mxu0
        %s782 = scalar_lea.vmem %s4, 32
        %v783 = vld [vmem:[%s782] sm:$0xf]
        %v784 = vld [vmem:[%s782 + $0x4] sm:$0xf]
        %v785 = vld [vmem:[%s782 + $0x8] sm:$0xf]
        %v786 = vld [vmem:[%s782 + $0xc] sm:$0xf]
        %v787 = vlaneseq
        %v788 = vshrl.u32 %v787, 7
        %v789 = vsub.s32 2, %v788
        %v790 = vrot.slane %v657, %v789
        %v795 = vunpack.c.l.b16 %v783
        %v796 = vunpack.c.l.b16 %v784
        %v797 = vunpack.c.l.b16 %v785
        %v798 = vunpack.c.l.b16 %v786
        %v799 = vpack.c.b16 %v796, %v795
        %v800 = vpack.c.b16 %v798, %v797
        %803 = vmatprep.subr.bf16.mxu0 0
        %804 = vmatpush1.bf16.msra.mxu0 %v799
        %805 = vmatprep.subr.bf16.mxu0 0
        %806 = vmatpush1.bf16.msra.mxu0 %v800
        %807 = vmatprep.subr.bf16.mxu0 0
        %808 = vmatpush1.bf16.msra.mxu0 0
        %809 = vmatprep.subr.bf16.mxu0 0
        %810 = vmatpush1.bf16.msra.mxu0 0
        %811 = vmatprep.subr.bf16.mxu0 0
        %812 = vmatpush1.bf16.msra.mxu0 0
        %813 = vmatprep.subr.bf16.mxu0 0
        %814 = vmatpush1.bf16.msra.mxu0 0
        %815 = vmatprep.subr.bf16.mxu0 0
        %816 = vmatpush1.bf16.msra.mxu0 0
        %817 = vmatprep.subr.bf16.mxu0 0
        %818 = vmatpush1.bf16.msra.mxu0 0
        %819 = vmatprep.subr.bf16.mxu0 0
        %820 = vmatpush1.bf16.msra.mxu0 0
        %821 = vmatprep.subr.bf16.mxu0 0
        %822 = vmatpush1.bf16.msra.mxu0 0
        %823 = vmatprep.subr.bf16.mxu0 0
        %824 = vmatpush1.bf16.msra.mxu0 0
        %825 = vmatprep.subr.bf16.mxu0 0
        %826 = vmatpush1.bf16.msra.mxu0 0
        %827 = vmatprep.subr.bf16.mxu0 0
        %828 = vmatpush1.bf16.msra.mxu0 0
        %829 = vmatprep.subr.bf16.mxu0 0
        %830 = vmatpush1.bf16.msra.mxu0 0
        %831 = vmatprep.subr.bf16.mxu0 0
        %832 = vmatpush1.bf16.msra.mxu0 0
        %833 = vmatprep.subr.bf16.mxu0 0
        %834 = vmatpush1.bf16.msra.mxu0 0
        %835 = vmatprep.mubr.bf16.mxu0 0
        %836 = vmatmul.mubr.bf16.gmra.mrb[0].mxu0 %v679
        %v837 = vpop.f32.mrb[0].mxu0
        %v838 = vadd.f32 %v790, %v837
        %v839 = vpop.f32.mrb[0].mxu0
        %v840 = vpop.f32.mrb[0].mxu0
        %v841 = vpop.f32.mrb[0].mxu0
        %842 = vdwg.mxu0
        %v843 = vpack.c.bf16 %v716, %v716
        %v844 = vpack.c.bf16 %v777, %v777
        %v845 = vpack.c.bf16 %v838, %v838
        %vm846 = vcmask 130048
        %v848 = vsel %vm846, %v843, 0
        %v851 = vsel %vm846, %v844, 0
        %853 = vmatprep.subr.bf16.mxu0 0
        %854 = vmatpush1.bf16.xpose.msra.mxu0 %v851
        %855 = vmatprep.subr.bf16.mxu0 0
        %856 = vmatpush1.bf16.xpose.msra.mxu0 0
        %857 = vmatprep.subr.bf16.mxu0 0
        %858 = vmatpush1.bf16.xpose.msra.mxu0 0
        %859 = vmatprep.subr.bf16.mxu0 0
        %860 = vmatpush1.bf16.xpose.msra.mxu0 0
        %861 = vmatprep.subr.bf16.mxu0 0
        %862 = vmatpush1.bf16.xpose.msra.mxu0 0
        %863 = vmatprep.subr.bf16.mxu0 0
        %864 = vmatpush1.bf16.xpose.msra.mxu0 0
        %865 = vmatprep.subr.bf16.mxu0 0
        %866 = vmatpush1.bf16.xpose.msra.mxu0 0
        %867 = vmatprep.subr.bf16.mxu0 0
        %868 = vmatpush1.bf16.xpose.msra.mxu0 0
        %869 = vmatprep.subr.bf16.mxu0 0
        %870 = vmatpush1.bf16.xpose.msra.mxu0 0
        %871 = vmatprep.subr.bf16.mxu0 0
        %872 = vmatpush1.bf16.xpose.msra.mxu0 0
        %873 = vmatprep.subr.bf16.mxu0 0
        %874 = vmatpush1.bf16.xpose.msra.mxu0 0
        %875 = vmatprep.subr.bf16.mxu0 0
        %876 = vmatpush1.bf16.xpose.msra.mxu0 0
        %877 = vmatprep.subr.bf16.mxu0 0
        %878 = vmatpush1.bf16.xpose.msra.mxu0 0
        %879 = vmatprep.subr.bf16.mxu0 0
        %880 = vmatpush1.bf16.xpose.msra.mxu0 0
        %881 = vmatprep.subr.bf16.mxu0 0
        %882 = vmatpush1.bf16.xpose.msra.mxu0 0
        %883 = vmatprep.subr.bf16.mxu0 0
        %884 = vmatpush1.bf16.xpose.msra.mxu0 0
        %885 = vmatprep.mubr.bf16.mxu0 0
        %886 = vmatmul.mubr.bf16.gmra.mrb[0].mxu0 %v848
        %v887 = vpop.f32.mrb[0].mxu0
        %v888 = vadd.f32 0.0, %v887
        %v889 = vpop.f32.mrb[0].mxu0
        %v890 = vpop.f32.mrb[0].mxu0
        %v891 = vpop.f32.mrb[0].mxu0
        %892 = vdwg.mxu0
        %v893 = vmul.f32 %v888, 0.25
        %v894 = vadd.f32 %v893, %v656
        %vm895 = vcmask 64512
        %v896 = vsel %vm895, %v894, -inf
        %897 = vmax.xlane.f32.xlu0 %v896
        %v898 = vpop.xlane.xlu0 %897
        %v899 = vsub.f32 %v894, %v898
        %v900 = vmul.f32 %v899, 1.442695
        %v901 = vpow.pop %v900
        %v902 = vsel %vm895, %v901, 0.0
        %903 = vadd.xlane.f32.xlu0 %v902
        %v904 = vpop.xlane.xlu0 %903
        %v905 = vrcp.pop %v904
        %v906 = vmul.f32 %v901, %v905
        %v907 = vpack.c.bf16 %v906, %v906
        %v909 = vsel %vm895, %v907, 0
        %vm911 = vcmask 1043456
        %v913 = vsel %vm911, %v845, 0
        %915 = vmatprep.subr.bf16.mxu0 0
        %916 = vmatpush1.bf16.msra.mxu0 %v913
        %917 = vmatprep.subr.bf16.mxu0 0
        %918 = vmatpush1.bf16.msra.mxu0 0
        %919 = vmatprep.subr.bf16.mxu0 0
        %920 = vmatpush1.bf16.msra.mxu0 0
        %921 = vmatprep.subr.bf16.mxu0 0
        %922 = vmatpush1.bf16.msra.mxu0 0
        %923 = vmatprep.subr.bf16.mxu0 0
        %924 = vmatpush1.bf16.msra.mxu0 0
        %925 = vmatprep.subr.bf16.mxu0 0
        %926 = vmatpush1.bf16.msra.mxu0 0
        %927 = vmatprep.subr.bf16.mxu0 0
        %928 = vmatpush1.bf16.msra.mxu0 0
        %929 = vmatprep.subr.bf16.mxu0 0
        %930 = vmatpush1.bf16.msra.mxu0 0
        %931 = vmatprep.subr.bf16.mxu0 0
        %932 = vmatpush1.bf16.msra.mxu0 0
        %933 = vmatprep.subr.bf16.mxu0 0
        %934 = vmatpush1.bf16.msra.mxu0 0
        %935 = vmatprep.subr.bf16.mxu0 0
        %936 = vmatpush1.bf16.msra.mxu0 0
        %937 = vmatprep.subr.bf16.mxu0 0
        %938 = vmatpush1.bf16.msra.mxu0 0
        %939 = vmatprep.subr.bf16.mxu0 0
        %940 = vmatpush1.bf16.msra.mxu0 0
        %941 = vmatprep.subr.bf16.mxu0 0
        %942 = vmatpush1.bf16.msra.mxu0 0
        %943 = vmatprep.subr.bf16.mxu0 0
        %944 = vmatpush1.bf16.msra.mxu0 0
        %945 = vmatprep.subr.bf16.mxu0 0
        %946 = vmatpush1.bf16.msra.mxu0 0
        %947 = vmatprep.mubr.bf16.mxu0 0
        %948 = vmatmul.mubr.bf16.gmra.mrb[0].mxu0 %v909
        %v949 = vpop.f32.mrb[0].mxu0
        %v950 = vadd.f32 0.0, %v949
        %v951 = vpop.f32.mrb[0].mxu0
        %v952 = vpop.f32.mrb[0].mxu0
        %v953 = vpop.f32.mrb[0].mxu0
        %954 = vdwg.mxu0
        %955 = vst.msk [vmem:[#allocation2] sm:$0xff] %vm846, %v950
        %957 = vrot.lane.b32.xlu0 %v843, 112
        %v958 = vpop.permute.xlu0 %957
        %960 = vrot.lane.b32.xlu0 %v844, 112
        %v961 = vpop.permute.xlu0 %960
        %v963 = vsel %vm846, %v958, 0
        %v966 = vsel %vm846, %v961, 0
        %968 = vmatprep.subr.bf16.mxu0 0
        %969 = vmatpush1.bf16.xpose.msra.mxu0 %v966
        %970 = vmatprep.subr.bf16.mxu0 0
        %971 = vmatpush1.bf16.xpose.msra.mxu0 0
        %972 = vmatprep.subr.bf16.mxu0 0
        %973 = vmatpush1.bf16.xpose.msra.mxu0 0
        %974 = vmatprep.subr.bf16.mxu0 0
        %975 = vmatpush1.bf16.xpose.msra.mxu0 0
        %976 = vmatprep.subr.bf16.mxu0 0
        %977 = vmatpush1.bf16.xpose.msra.mxu0 0
        %978 = vmatprep.subr.bf16.mxu0 0
        %979 = vmatpush1.bf16.xpose.msra.mxu0 0
        %980 = vmatprep.subr.bf16.mxu0 0
        %981 = vmatpush1.bf16.xpose.msra.mxu0 0
        %982 = vmatprep.subr.bf16.mxu0 0
        %983 = vmatpush1.bf16.xpose.msra.mxu0 0
        %984 = vmatprep.subr.bf16.mxu0 0
        %985 = vmatpush1.bf16.xpose.msra.mxu0 0
        %986 = vmatprep.subr.bf16.mxu0 0
        %987 = vmatpush1.bf16.xpose.msra.mxu0 0
        %988 = vmatprep.subr.bf16.mxu0 0
        %989 = vmatpush1.bf16.xpose.msra.mxu0 0
        %990 = vmatprep.subr.bf16.mxu0 0
        %991 = vmatpush1.bf16.xpose.msra.mxu0 0
        %992 = vmatprep.subr.bf16.mxu0 0
        %993 = vmatpush1.bf16.xpose.msra.mxu0 0
        %994 = vmatprep.subr.bf16.mxu0 0
        %995 = vmatpush1.bf16.xpose.msra.mxu0 0
        %996 = vmatprep.subr.bf16.mxu0 0
        %997 = vmatpush1.bf16.xpose.msra.mxu0 0
        %998 = vmatprep.subr.bf16.mxu0 0
        %999 = vmatpush1.bf16.xpose.msra.mxu0 0
        %1000 = vmatprep.mubr.bf16.mxu0 0
        %1001 = vmatmul.mubr.bf16.gmra.mrb[0].mxu0 %v963
        %v1002 = vpop.f32.mrb[0].mxu0
        %v1003 = vadd.f32 0.0, %v1002
        %v1004 = vpop.f32.mrb[0].mxu0
        %v1005 = vpop.f32.mrb[0].mxu0
        %v1006 = vpop.f32.mrb[0].mxu0
        %1007 = vdwg.mxu0
        %v1008 = vmul.f32 %v1003, 0.25
        %v1009 = vadd.f32 %v1008, %v656
        %v1010 = vsel %vm895, %v1009, -inf
        %1011 = vmax.xlane.f32.xlu0 %v1010
        %v1012 = vpop.xlane.xlu0 %1011
        %v1013 = vsub.f32 %v1009, %v1012
        %v1014 = vmul.f32 %v1013, 1.442695
        %v1015 = vpow.pop %v1014
        %v1016 = vsel %vm895, %v1015, 0.0
        %1017 = vadd.xlane.f32.xlu0 %v1016
        %v1018 = vpop.xlane.xlu0 %1017
        %v1019 = vrcp.pop %v1018
        %v1020 = vmul.f32 %v1015, %v1019
        %v1021 = vpack.c.bf16 %v1020, %v1020
        %1023 = vrot.lane.b32.xlu0 %v845, 112
        %v1024 = vpop.permute.xlu0 %1023
        %v1026 = vsel %vm895, %v1021, 0
        %v1029 = vsel %vm911, %v1024, 0
        %1031 = vmatprep.subr.bf16.mxu0 0
        %1032 = vmatpush1.bf16.msra.mxu0 %v1029
        %1033 = vmatprep.subr.bf16.mxu0 0
        %1034 = vmatpush1.bf16.msra.mxu0 0
        %1035 = vmatprep.subr.bf16.mxu0 0
        %1036 = vmatpush1.bf16.msra.mxu0 0
        %1037 = vmatprep.subr.bf16.mxu0 0
        %1038 = vmatpush1.bf16.msra.mxu0 0
        %1039 = vmatprep.subr.bf16.mxu0 0
        %1040 = vmatpush1.bf16.msra.mxu0 0
        %1041 = vmatprep.subr.bf16.mxu0 0
        %1042 = vmatpush1.bf16.msra.mxu0 0
        %1043 = vmatprep.subr.bf16.mxu0 0
        %1044 = vmatpush1.bf16.msra.mxu0 0
        %1045 = vmatprep.subr.bf16.mxu0 0
        %1046 = vmatpush1.bf16.msra.mxu0 0
        %1047 = vmatprep.subr.bf16.mxu0 0
        %1048 = vmatpush1.bf16.msra.mxu0 0
        %1049 = vmatprep.subr.bf16.mxu0 0
        %1050 = vmatpush1.bf16.msra.mxu0 0
        %1051 = vmatprep.subr.bf16.mxu0 0
        %1052 = vmatpush1.bf16.msra.mxu0 0
        %1053 = vmatprep.subr.bf16.mxu0 0
        %1054 = vmatpush1.bf16.msra.mxu0 0
        %1055 = vmatprep.subr.bf16.mxu0 0
        %1056 = vmatpush1.bf16.msra.mxu0 0
        %1057 = vmatprep.subr.bf16.mxu0 0
        %1058 = vmatpush1.bf16.msra.mxu0 0
        %1059 = vmatprep.subr.bf16.mxu0 0
        %1060 = vmatpush1.bf16.msra.mxu0 0
        %1061 = vmatprep.subr.bf16.mxu0 0
        %1062 = vmatpush1.bf16.msra.mxu0 0
        %1063 = vmatprep.mubr.bf16.mxu0 0
        %1064 = vmatmul.mubr.bf16.gmra.mrb[0].mxu0 %v1026
        %v1065 = vpop.f32.mrb[0].mxu0
        %v1066 = vadd.f32 0.0, %v1065
        %v1067 = vpop.f32.mrb[0].mxu0
        %v1068 = vpop.f32.mrb[0].mxu0
        %v1069 = vpop.f32.mrb[0].mxu0
        %1070 = vdwg.mxu0
        %1072 = vrot.lane.b32.xlu0 %v1066, 16
        %v1073 = vpop.permute.xlu0 %1072
        %vm1075 = vcmask 261248
        %1076 = vst.msk [vmem:[#allocation2] sm:$0xff] %vm1075, %v1073
        %v1077 = vld [vmem:[#allocation2] sm:$0xff]
        %v1078 = vpack.c.bf16 %v1077, %v1077
        %s1079 = scalar_lea.vmem %s4, 48
        %v1080 = vld [vmem:[%s1079] sm:$0xf]
        %v1081 = vld [vmem:[%s1079 + $0x4] sm:$0xf]
        %v1082 = vld [vmem:[%s1079 + $0x8] sm:$0xf]
        %v1083 = vld [vmem:[%s1079 + $0xc] sm:$0xf]
        %v1084 = vlaneseq
        %v1085 = vshrl.u32 %v1084, 7
        %v1086 = vsub.s32 3, %v1085
        %v1087 = vrot.slane %v657, %v1086
        %v1092 = vunpack.c.l.b16 %v1080
        %v1093 = vunpack.c.l.b16 %v1081
        %v1094 = vunpack.c.l.b16 %v1082
        %v1095 = vunpack.c.l.b16 %v1083
        %v1096 = vpack.c.b16 %v1093, %v1092
        %v1097 = vpack.c.b16 %v1095, %v1094
        %v1101 = vsel %vm630, %v1078, 0
        %1103 = vmatprep.subr.bf16.mxu0 0
        %1104 = vmatpush1.bf16.msra.mxu0 %v1096
        %1105 = vmatprep.subr.bf16.mxu0 0
        %1106 = vmatpush1.bf16.msra.mxu0 %v1097
        %1107 = vmatprep.subr.bf16.mxu0 0
        %1108 = vmatpush1.bf16.msra.mxu0 0
        %1109 = vmatprep.subr.bf16.mxu0 0
        %1110 = vmatpush1.bf16.msra.mxu0 0
        %1111 = vmatprep.subr.bf16.mxu0 0
        %1112 = vmatpush1.bf16.msra.mxu0 0
        %1113 = vmatprep.subr.bf16.mxu0 0
        %1114 = vmatpush1.bf16.msra.mxu0 0
        %1115 = vmatprep.subr.bf16.mxu0 0
        %1116 = vmatpush1.bf16.msra.mxu0 0
        %1117 = vmatprep.subr.bf16.mxu0 0
        %1118 = vmatpush1.bf16.msra.mxu0 0
        %1119 = vmatprep.subr.bf16.mxu0 0
        %1120 = vmatpush1.bf16.msra.mxu0 0
        %1121 = vmatprep.subr.bf16.mxu0 0
        %1122 = vmatpush1.bf16.msra.mxu0 0
        %1123 = vmatprep.subr.bf16.mxu0 0
        %1124 = vmatpush1.bf16.msra.mxu0 0
        %1125 = vmatprep.subr.bf16.mxu0 0
        %1126 = vmatpush1.bf16.msra.mxu0 0
        %1127 = vmatprep.subr.bf16.mxu0 0
        %1128 = vmatpush1.bf16.msra.mxu0 0
        %1129 = vmatprep.subr.bf16.mxu0 0
        %1130 = vmatpush1.bf16.msra.mxu0 0
        %1131 = vmatprep.subr.bf16.mxu0 0
        %1132 = vmatpush1.bf16.msra.mxu0 0
        %1133 = vmatprep.subr.bf16.mxu0 0
        %1134 = vmatpush1.bf16.msra.mxu0 0
        %1135 = vmatprep.mubr.bf16.mxu0 0
        %1136 = vmatmul.mubr.bf16.gmra.mrb[0].mxu0 %v1101
        %v1137 = vpop.f32.mrb[0].mxu0
        %v1138 = vadd.f32 %v1087, %v1137
        %v1139 = vpop.f32.mrb[0].mxu0
        %v1140 = vpop.f32.mrb[0].mxu0
        %v1141 = vpop.f32.mrb[0].mxu0
        %1142 = vdwg.mxu0
        %v1143 = vadd.f32 %v627, %v1138
        %v1144 = vsel %vm630, %v1143, 0.0
        %1145 = vadd.xlane.f32.xlu0 %v1144
        %v1146 = vpop.xlane.xlu0 %1145
        %v1147 = vmul.f32 %v1146, %v634
        %v1148 = vsub.f32 %v1143, %v1147
        %v1149 = vmul.f32 %v1148, %v1148
        %v1150 = vsel %vm630, %v1149, 0.0
        %1151 = vadd.xlane.f32.xlu0 %v1150
        %v1152 = vpop.xlane.xlu0 %1151
        %v1153 = vmul.f32 %v1152, %v634
        %v1154 = vadd.f32 %v1153, 1e-06
        %v1155 = vrsqrt.pop %v1154
        %v1156 = vmul.f32 %v1148, %v1155
        %v1157 = vlaneseq
        %v1158 = vshrl.u32 %v1157, 7
        %v1159 = vsub.s32 1, %v1158
        %v1160 = vrot.slane %v625, %v1159
        %v1161 = vmul.f32 %v1156, %v1160
        %v1162 = vlaneseq
        %v1163 = vshrl.u32 %v1162, 7
        %v1164 = vsub.s32 1, %v1163
        %v1165 = vrot.slane %v626, %v1164
        %v1166 = vadd.f32 %v1161, %v1165
        %v1167 = vpack.c.bf16 %v1166, %v1166
        %v1168 = vld [vmem:[%s623] sm:$0xff]
        %v1169 = vld [vmem:[#allocation8] sm:$0xf]
        %v1170 = vld [vmem:[%s6] sm:$0xf]
        %v1171 = vld [vmem:[%s6 + $0x4] sm:$0xf]
        %v1172 = vld [vmem:[%s6 + $0x8] sm:$0xf]
        %v1173 = vld [vmem:[%s6 + $0xc] sm:$0xf]
        %v1174 = vlaneseq
        %v1175 = vshrl.u32 %v1174, 7
        %v1176 = vsub.s32 0, %v1175
        %v1177 = vrot.slane %v1169, %v1176
        %v1182 = vunpack.c.l.b16 %v1170
        %v1183 = vunpack.c.l.b16 %v1171
        %v1184 = vunpack.c.l.b16 %v1172
        %v1185 = vunpack.c.l.b16 %v1173
        %v1186 = vpack.c.b16 %v1183, %v1182
        %v1187 = vpack.c.b16 %v1185, %v1184
        %v1191 = vsel %vm630, %v1167, 0
        %1193 = vmatprep.subr.bf16.mxu0 0
        %1194 = vmatpush1.bf16.msra.mxu0 %v1186
        %1195 = vmatprep.subr.bf16.mxu0 0
        %1196 = vmatpush1.bf16.msra.mxu0 %v1187
        %1197 = vmatprep.subr.bf16.mxu0 0
        %1198 = vmatpush1.bf16.msra.mxu0 0
        %1199 = vmatprep.subr.bf16.mxu0 0
        %1200 = vmatpush1.bf16.msra.mxu0 0
        %1201 = vmatprep.subr.bf16.mxu0 0
        %1202 = vmatpush1.bf16.msra.mxu0 0
        %1203 = vmatprep.subr.bf16.mxu0 0
        %1204 = vmatpush1.bf16.msra.mxu0 0
        %1205 = vmatprep.subr.bf16.mxu0 0
        %1206 = vmatpush1.bf16.msra.mxu0 0
        %1207 = vmatprep.subr.bf16.mxu0 0
        %1208 = vmatpush1.bf16.msra.mxu0 0
        %1209 = vmatprep.subr.bf16.mxu0 0
        %1210 = vmatpush1.bf16.msra.mxu0 0
        %1211 = vmatprep.subr.bf16.mxu0 0
        %1212 = vmatpush1.bf16.msra.mxu0 0
        %1213 = vmatprep.subr.bf16.mxu0 0
        %1214 = vmatpush1.bf16.msra.mxu0 0
        %1215 = vmatprep.subr.bf16.mxu0 0
        %1216 = vmatpush1.bf16.msra.mxu0 0
        %1217 = vmatprep.subr.bf16.mxu0 0
        %1218 = vmatpush1.bf16.msra.mxu0 0
        %1219 = vmatprep.subr.bf16.mxu0 0
        %1220 = vmatpush1.bf16.msra.mxu0 0
        %1221 = vmatprep.subr.bf16.mxu0 0
        %1222 = vmatpush1.bf16.msra.mxu0 0
        %1223 = vmatprep.subr.bf16.mxu0 0
        %1224 = vmatpush1.bf16.msra.mxu0 0
        %1225 = vmatprep.mubr.bf16.mxu0 0
        %1226 = vmatmul.mubr.bf16.gmra.mrb[0].mxu0 %v1191
        %v1227 = vpop.f32.mrb[0].mxu0
        %v1228 = vadd.f32 %v1177, %v1227
        %v1229 = vpop.f32.mrb[0].mxu0
        %v1230 = vpop.f32.mrb[0].mxu0
        %v1231 = vpop.f32.mrb[0].mxu0
        %1232 = vdwg.mxu0
        %s1233 = scalar_lea.vmem %s6, 16
        %v1234 = vld [vmem:[%s1233] sm:$0xf]
        %v1235 = vld [vmem:[%s1233 + $0x4] sm:$0xf]
        %v1236 = vld [vmem:[%s1233 + $0x8] sm:$0xf]
        %v1237 = vld [vmem:[%s1233 + $0xc] sm:$0xf]
        %v1238 = vlaneseq
        %v1239 = vshrl.u32 %v1238, 7
        %v1240 = vsub.s32 1, %v1239
        %v1241 = vrot.slane %v1169, %v1240
        %v1246 = vunpack.c.l.b16 %v1234
        %v1247 = vunpack.c.l.b16 %v1235
        %v1248 = vunpack.c.l.b16 %v1236
        %v1249 = vunpack.c.l.b16 %v1237
        %v1250 = vpack.c.b16 %v1247, %v1246
        %v1251 = vpack.c.b16 %v1249, %v1248
        %v1255 = vsel %vm630, %v629, 0
        %1257 = vmatprep.subr.bf16.mxu0 0
        %1258 = vmatpush1.bf16.msra.mxu0 %v1250
        %1259 = vmatprep.subr.bf16.mxu0 0
        %1260 = vmatpush1.bf16.msra.mxu0 %v1251
        %1261 = vmatprep.subr.bf16.mxu0 0
        %1262 = vmatpush1.bf16.msra.mxu0 0
        %1263 = vmatprep.subr.bf16.mxu0 0
        %1264 = vmatpush1.bf16.msra.mxu0 0
        %1265 = vmatprep.subr.bf16.mxu0 0
        %1266 = vmatpush1.bf16.msra.mxu0 0
        %1267 = vmatprep.subr.bf16.mxu0 0
        %1268 = vmatpush1.bf16.msra.mxu0 0
        %1269 = vmatprep.subr.bf16.mxu0 0
        %1270 = vmatpush1.bf16.msra.mxu0 0
        %1271 = vmatprep.subr.bf16.mxu0 0
        %1272 = vmatpush1.bf16.msra.mxu0 0
        %1273 = vmatprep.subr.bf16.mxu0 0
        %1274 = vmatpush1.bf16.msra.mxu0 0
        %1275 = vmatprep.subr.bf16.mxu0 0
        %1276 = vmatpush1.bf16.msra.mxu0 0
        %1277 = vmatprep.subr.bf16.mxu0 0
        %1278 = vmatpush1.bf16.msra.mxu0 0
        %1279 = vmatprep.subr.bf16.mxu0 0
        %1280 = vmatpush1.bf16.msra.mxu0 0
        %1281 = vmatprep.subr.bf16.mxu0 0
        %1282 = vmatpush1.bf16.msra.mxu0 0
        %1283 = vmatprep.subr.bf16.mxu0 0
        %1284 = vmatpush1.bf16.msra.mxu0 0
        %1285 = vmatprep.subr.bf16.mxu0 0
        %1286 = vmatpush1.bf16.msra.mxu0 0
        %1287 = vmatprep.subr.bf16.mxu0 0
        %1288 = vmatpush1.bf16.msra.mxu0 0
        %1289 = vmatprep.mubr.bf16.mxu0 0
        %1290 = vmatmul.mubr.bf16.gmra.mrb[0].mxu0 %v1255
        %v1291 = vpop.f32.mrb[0].mxu0
        %v1292 = vadd.f32 %v1241, %v1291
        %v1293 = vpop.f32.mrb[0].mxu0
        %v1294 = vpop.f32.mrb[0].mxu0
        %v1295 = vpop.f32.mrb[0].mxu0
        %1296 = vdwg.mxu0
        %s1297 = scalar_lea.vmem %s6, 32
        %v1298 = vld [vmem:[%s1297] sm:$0xf]
        %v1299 = vld [vmem:[%s1297 + $0x4] sm:$0xf]
        %v1300 = vld [vmem:[%s1297 + $0x8] sm:$0xf]
        %v1301 = vld [vmem:[%s1297 + $0xc] sm:$0xf]
        %v1302 = vlaneseq
        %v1303 = vshrl.u32 %v1302, 7
        %v1304 = vsub.s32 2, %v1303
        %v1305 = vrot.slane %v1169, %v1304
        %v1310 = vunpack.c.l.b16 %v1298
        %v1311 = vunpack.c.l.b16 %v1299
        %v1312 = vunpack.c.l.b16 %v1300
        %v1313 = vunpack.c.l.b16 %v1301
        %v1314 = vpack.c.b16 %v1311, %v1310
        %v1315 = vpack.c.b16 %v1313, %v1312
        %1318 = vmatprep.subr.bf16.mxu0 0
        %1319 = vmatpush1.bf16.msra.mxu0 %v1314
        %1320 = vmatprep.subr.bf16.mxu0 0
        %1321 = vmatpush1.bf16.msra.mxu0 %v1315
        %1322 = vmatprep.subr.bf16.mxu0 0
        %1323 = vmatpush1.bf16.msra.mxu0 0
        %1324 = vmatprep.subr.bf16.mxu0 0
        %1325 = vmatpush1.bf16.msra.mxu0 0
        %1326 = vmatprep.subr.bf16.mxu0 0
        %1327 = vmatpush1.bf16.msra.mxu0 0
        %1328 = vmatprep.subr.bf16.mxu0 0
        %1329 = vmatpush1.bf16.msra.mxu0 0
        %1330 = vmatprep.subr.bf16.mxu0 0
        %1331 = vmatpush1.bf16.msra.mxu0 0
        %1332 = vmatprep.subr.bf16.mxu0 0
        %1333 = vmatpush1.bf16.msra.mxu0 0
        %1334 = vmatprep.subr.bf16.mxu0 0
        %1335 = vmatpush1.bf16.msra.mxu0 0
        %1336 = vmatprep.subr.bf16.mxu0 0
        %1337 = vmatpush1.bf16.msra.mxu0 0
        %1338 = vmatprep.subr.bf16.mxu0 0
        %1339 = vmatpush1.bf16.msra.mxu0 0
        %1340 = vmatprep.subr.bf16.mxu0 0
        %1341 = vmatpush1.bf16.msra.mxu0 0
        %1342 = vmatprep.subr.bf16.mxu0 0
        %1343 = vmatpush1.bf16.msra.mxu0 0
        %1344 = vmatprep.subr.bf16.mxu0 0
        %1345 = vmatpush1.bf16.msra.mxu0 0
        %1346 = vmatprep.subr.bf16.mxu0 0
        %1347 = vmatpush1.bf16.msra.mxu0 0
        %1348 = vmatprep.subr.bf16.mxu0 0
        %1349 = vmatpush1.bf16.msra.mxu0 0
        %1350 = vmatprep.mubr.bf16.mxu0 0
        %1351 = vmatmul.mubr.bf16.gmra.mrb[0].mxu0 %v1255
        %v1352 = vpop.f32.mrb[0].mxu0
        %v1353 = vadd.f32 %v1305, %v1352
        %v1354 = vpop.f32.mrb[0].mxu0
        %v1355 = vpop.f32.mrb[0].mxu0
        %v1356 = vpop.f32.mrb[0].mxu0
        %1357 = vdwg.mxu0
        %v1358 = vpack.c.bf16 %v1228, %v1228
        %v1359 = vpack.c.bf16 %v1292, %v1292
        %v1360 = vpack.c.bf16 %v1353, %v1353
        %v1362 = vsel %vm846, %v1358, 0
        %v1365 = vsel %vm846, %v1359, 0
        %1367 = vmatprep.subr.bf16.mxu0 0
        %1368 = vmatpush1.bf16.xpose.msra.mxu0 %v1365
        %1369 = vmatprep.subr.bf16.mxu0 0
        %1370 = vmatpush1.bf16.xpose.msra.mxu0 0
        %1371 = vmatprep.subr.bf16.mxu0 0
        %1372 = vmatpush1.bf16.xpose.msra.mxu0 0
        %1373 = vmatprep.subr.bf16.mxu0 0
        %1374 = vmatpush1.bf16.xpose.msra.mxu0 0
        %1375 = vmatprep.subr.bf16.mxu0 0
        %1376 = vmatpush1.bf16.xpose.msra.mxu0 0
        %1377 = vmatprep.subr.bf16.mxu0 0
        %1378 = vmatpush1.bf16.xpose.msra.mxu0 0
        %1379 = vmatprep.subr.bf16.mxu0 0
        %1380 = vmatpush1.bf16.xpose.msra.mxu0 0
        %1381 = vmatprep.subr.bf16.mxu0 0
        %1382 = vmatpush1.bf16.xpose.msra.mxu0 0
        %1383 = vmatprep.subr.bf16.mxu0 0
        %1384 = vmatpush1.bf16.xpose.msra.mxu0 0
        %1385 = vmatprep.subr.bf16.mxu0 0
        %1386 = vmatpush1.bf16.xpose.msra.mxu0 0
        %1387 = vmatprep.subr.bf16.mxu0 0
        %1388 = vmatpush1.bf16.xpose.msra.mxu0 0
        %1389 = vmatprep.subr.bf16.mxu0 0
        %1390 = vmatpush1.bf16.xpose.msra.mxu0 0
        %1391 = vmatprep.subr.bf16.mxu0 0
        %1392 = vmatpush1.bf16.xpose.msra.mxu0 0
        %1393 = vmatprep.subr.bf16.mxu0 0
        %1394 = vmatpush1.bf16.xpose.msra.mxu0 0
        %1395 = vmatprep.subr.bf16.mxu0 0
        %1396 = vmatpush1.bf16.xpose.msra.mxu0 0
        %1397 = vmatprep.subr.bf16.mxu0 0
        %1398 = vmatpush1.bf16.xpose.msra.mxu0 0
        %1399 = vmatprep.mubr.bf16.mxu0 0
        %1400 = vmatmul.mubr.bf16.gmra.mrb[0].mxu0 %v1362
        %v1401 = vpop.f32.mrb[0].mxu0
        %v1402 = vadd.f32 0.0, %v1401
        %v1403 = vpop.f32.mrb[0].mxu0
        %v1404 = vpop.f32.mrb[0].mxu0
        %v1405 = vpop.f32.mrb[0].mxu0
        %1406 = vdwg.mxu0
        %v1407 = vmul.f32 %v1402, 0.25
        %v1408 = vadd.f32 %v1407, %v1168
        %v1409 = vsel %vm895, %v1408, -inf
        %1410 = vmax.xlane.f32.xlu0 %v1409
        %v1411 = vpop.xlane.xlu0 %1410
        %v1412 = vsub.f32 %v1408, %v1411
        %v1413 = vmul.f32 %v1412, 1.442695
        %v1414 = vpow.pop %v1413
        %v1415 = vsel %vm895, %v1414, 0.0
        %1416 = vadd.xlane.f32.xlu0 %v1415
        %v1417 = vpop.xlane.xlu0 %1416
        %v1418 = vrcp.pop %v1417
        %v1419 = vmul.f32 %v1414, %v1418
        %v1420 = vpack.c.bf16 %v1419, %v1419
        %v1422 = vsel %vm895, %v1420, 0
        %v1425 = vsel %vm911, %v1360, 0
        %1427 = vmatprep.subr.bf16.mxu0 0
        %1428 = vmatpush1.bf16.msra.mxu0 %v1425
        %1429 = vmatprep.subr.bf16.mxu0 0
        %1430 = vmatpush1.bf16.msra.mxu0 0
        %1431 = vmatprep.subr.bf16.mxu0 0
        %1432 = vmatpush1.bf16.msra.mxu0 0
        %1433 = vmatprep.subr.bf16.mxu0 0
        %1434 = vmatpush1.bf16.msra.mxu0 0
        %1435 = vmatprep.subr.bf16.mxu0 0
        %1436 = vmatpush1.bf16.msra.mxu0 0
        %1437 = vmatprep.subr.bf16.mxu0 0
        %1438 = vmatpush1.bf16.msra.mxu0 0
        %1439 = vmatprep.subr.bf16.mxu0 0
        %1440 = vmatpush1.bf16.msra.mxu0 0
        %1441 = vmatprep.subr.bf16.mxu0 0
        %1442 = vmatpush1.bf16.msra.mxu0 0
        %1443 = vmatprep.subr.bf16.mxu0 0
        %1444 = vmatpush1.bf16.msra.mxu0 0
        %1445 = vmatprep.subr.bf16.mxu0 0
        %1446 = vmatpush1.bf16.msra.mxu0 0
        %1447 = vmatprep.subr.bf16.mxu0 0
        %1448 = vmatpush1.bf16.msra.mxu0 0
        %1449 = vmatprep.subr.bf16.mxu0 0
        %1450 = vmatpush1.bf16.msra.mxu0 0
        %1451 = vmatprep.subr.bf16.mxu0 0
        %1452 = vmatpush1.bf16.msra.mxu0 0
        %1453 = vmatprep.subr.bf16.mxu0 0
        %1454 = vmatpush1.bf16.msra.mxu0 0
        %1455 = vmatprep.subr.bf16.mxu0 0
        %1456 = vmatpush1.bf16.msra.mxu0 0
        %1457 = vmatprep.subr.bf16.mxu0 0
        %1458 = vmatpush1.bf16.msra.mxu0 0
        %1459 = vmatprep.mubr.bf16.mxu0 0
        %1460 = vmatmul.mubr.bf16.gmra.mrb[0].mxu0 %v1422
        %v1461 = vpop.f32.mrb[0].mxu0
        %v1462 = vadd.f32 0.0, %v1461
        %v1463 = vpop.f32.mrb[0].mxu0
        %v1464 = vpop.f32.mrb[0].mxu0
        %v1465 = vpop.f32.mrb[0].mxu0
        %1466 = vdwg.mxu0
        %1467 = vst.msk [vmem:[#allocation2] sm:$0xff] %vm846, %v1462
        %1469 = vrot.lane.b32.xlu0 %v1358, 112
        %v1470 = vpop.permute.xlu0 %1469
        %1472 = vrot.lane.b32.xlu0 %v1359, 112
        %v1473 = vpop.permute.xlu0 %1472
        %v1475 = vsel %vm846, %v1470, 0
        %v1478 = vsel %vm846, %v1473, 0
        %1480 = vmatprep.subr.bf16.mxu0 0
        %1481 = vmatpush1.bf16.xpose.msra.mxu0 %v1478
        %1482 = vmatprep.subr.bf16.mxu0 0
        %1483 = vmatpush1.bf16.xpose.msra.mxu0 0
        %1484 = vmatprep.subr.bf16.mxu0 0
        %1485 = vmatpush1.bf16.xpose.msra.mxu0 0
        %1486 = vmatprep.subr.bf16.mxu0 0
        %1487 = vmatpush1.bf16.xpose.msra.mxu0 0
        %1488 = vmatprep.subr.bf16.mxu0 0
        %1489 = vmatpush1.bf16.xpose.msra.mxu0 0
        %1490 = vmatprep.subr.bf16.mxu0 0
        %1491 = vmatpush1.bf16.xpose.msra.mxu0 0
        %1492 = vmatprep.subr.bf16.mxu0 0
        %1493 = vmatpush1.bf16.xpose.msra.mxu0 0
        %1494 = vmatprep.subr.bf16.mxu0 0
        %1495 = vmatpush1.bf16.xpose.msra.mxu0 0
        %1496 = vmatprep.subr.bf16.mxu0 0
        %1497 = vmatpush1.bf16.xpose.msra.mxu0 0
        %1498 = vmatprep.subr.bf16.mxu0 0
        %1499 = vmatpush1.bf16.xpose.msra.mxu0 0
        %1500 = vmatprep.subr.bf16.mxu0 0
        %1501 = vmatpush1.bf16.xpose.msra.mxu0 0
        %1502 = vmatprep.subr.bf16.mxu0 0
        %1503 = vmatpush1.bf16.xpose.msra.mxu0 0
        %1504 = vmatprep.subr.bf16.mxu0 0
        %1505 = vmatpush1.bf16.xpose.msra.mxu0 0
        %1506 = vmatprep.subr.bf16.mxu0 0
        %1507 = vmatpush1.bf16.xpose.msra.mxu0 0
        %1508 = vmatprep.subr.bf16.mxu0 0
        %1509 = vmatpush1.bf16.xpose.msra.mxu0 0
        %1510 = vmatprep.subr.bf16.mxu0 0
        %1511 = vmatpush1.bf16.xpose.msra.mxu0 0
        %1512 = vmatprep.mubr.bf16.mxu0 0
        %1513 = vmatmul.mubr.bf16.gmra.mrb[0].mxu0 %v1475
        %v1514 = vpop.f32.mrb[0].mxu0
        %v1515 = vadd.f32 0.0, %v1514
        %v1516 = vpop.f32.mrb[0].mxu0
        %v1517 = vpop.f32.mrb[0].mxu0
        %v1518 = vpop.f32.mrb[0].mxu0
        %1519 = vdwg.mxu0
        %v1520 = vmul.f32 %v1515, 0.25
        %v1521 = vadd.f32 %v1520, %v1168
        %v1522 = vsel %vm895, %v1521, -inf
        %1523 = vmax.xlane.f32.xlu0 %v1522
        %v1524 = vpop.xlane.xlu0 %1523
        %v1525 = vsub.f32 %v1521, %v1524
        %v1526 = vmul.f32 %v1525, 1.442695
        %v1527 = vpow.pop %v1526
        %v1528 = vsel %vm895, %v1527, 0.0
        %1529 = vadd.xlane.f32.xlu0 %v1528
        %v1530 = vpop.xlane.xlu0 %1529
        %v1531 = vrcp.pop %v1530
        %v1532 = vmul.f32 %v1527, %v1531
        %v1533 = vpack.c.bf16 %v1532, %v1532
        %1535 = vrot.lane.b32.xlu0 %v1360, 112
        %v1536 = vpop.permute.xlu0 %1535
        %v1538 = vsel %vm895, %v1533, 0
        %v1541 = vsel %vm911, %v1536, 0
        %1543 = vmatprep.subr.bf16.mxu0 0
        %1544 = vmatpush1.bf16.msra.mxu0 %v1541
        %1545 = vmatprep.subr.bf16.mxu0 0
        %1546 = vmatpush1.bf16.msra.mxu0 0
        %1547 = vmatprep.subr.bf16.mxu0 0
        %1548 = vmatpush1.bf16.msra.mxu0 0
        %1549 = vmatprep.subr.bf16.mxu0 0
        %1550 = vmatpush1.bf16.msra.mxu0 0
        %1551 = vmatprep.subr.bf16.mxu0 0
        %1552 = vmatpush1.bf16.msra.mxu0 0
        %1553 = vmatprep.subr.bf16.mxu0 0
        %1554 = vmatpush1.bf16.msra.mxu0 0
        %1555 = vmatprep.subr.bf16.mxu0 0
        %1556 = vmatpush1.bf16.msra.mxu0 0
        %1557 = vmatprep.subr.bf16.mxu0 0
        %1558 = vmatpush1.bf16.msra.mxu0 0
        %1559 = vmatprep.subr.bf16.mxu0 0
        %1560 = vmatpush1.bf16.msra.mxu0 0
        %1561 = vmatprep.subr.bf16.mxu0 0
        %1562 = vmatpush1.bf16.msra.mxu0 0
        %1563 = vmatprep.subr.bf16.mxu0 0
        %1564 = vmatpush1.bf16.msra.mxu0 0
        %1565 = vmatprep.subr.bf16.mxu0 0
        %1566 = vmatpush1.bf16.msra.mxu0 0
        %1567 = vmatprep.subr.bf16.mxu0 0
        %1568 = vmatpush1.bf16.msra.mxu0 0
        %1569 = vmatprep.subr.bf16.mxu0 0
        %1570 = vmatpush1.bf16.msra.mxu0 0
        %1571 = vmatprep.subr.bf16.mxu0 0
        %1572 = vmatpush1.bf16.msra.mxu0 0
        %1573 = vmatprep.subr.bf16.mxu0 0
        %1574 = vmatpush1.bf16.msra.mxu0 0
        %1575 = vmatprep.mubr.bf16.mxu0 0
        %1576 = vmatmul.mubr.bf16.gmra.mrb[0].mxu0 %v1538
        %v1577 = vpop.f32.mrb[0].mxu0
        %v1578 = vadd.f32 0.0, %v1577
        %v1579 = vpop.f32.mrb[0].mxu0
        %v1580 = vpop.f32.mrb[0].mxu0
        %v1581 = vpop.f32.mrb[0].mxu0
        %1582 = vdwg.mxu0
        %1584 = vrot.lane.b32.xlu0 %v1578, 16
        %v1585 = vpop.permute.xlu0 %1584
        %1587 = vst.msk [vmem:[#allocation2] sm:$0xff] %vm1075, %v1585
        %v1588 = vld [vmem:[#allocation2] sm:$0xff]
        %v1589 = vpack.c.bf16 %v1588, %v1588
        %s1590 = scalar_lea.vmem %s6, 48
        %v1591 = vld [vmem:[%s1590] sm:$0xf]
        %v1592 = vld [vmem:[%s1590 + $0x4] sm:$0xf]
        %v1593 = vld [vmem:[%s1590 + $0x8] sm:$0xf]
        %v1594 = vld [vmem:[%s1590 + $0xc] sm:$0xf]
        %v1595 = vlaneseq
        %v1596 = vshrl.u32 %v1595, 7
        %v1597 = vsub.s32 3, %v1596
        %v1598 = vrot.slane %v1169, %v1597
        %v1603 = vunpack.c.l.b16 %v1591
        %v1604 = vunpack.c.l.b16 %v1592
        %v1605 = vunpack.c.l.b16 %v1593
        %v1606 = vunpack.c.l.b16 %v1594
        %v1607 = vpack.c.b16 %v1604, %v1603
        %v1608 = vpack.c.b16 %v1606, %v1605
        %v1612 = vsel %vm630, %v1589, 0
        %1614 = vmatprep.subr.bf16.mxu0 0
        %1615 = vmatpush1.bf16.msra.mxu0 %v1607
        %1616 = vmatprep.subr.bf16.mxu0 0
        %1617 = vmatpush1.bf16.msra.mxu0 %v1608
        %1618 = vmatprep.subr.bf16.mxu0 0
        %1619 = vmatpush1.bf16.msra.mxu0 0
        %1620 = vmatprep.subr.bf16.mxu0 0
        %1621 = vmatpush1.bf16.msra.mxu0 0
        %1622 = vmatprep.subr.bf16.mxu0 0
        %1623 = vmatpush1.bf16.msra.mxu0 0
        %1624 = vmatprep.subr.bf16.mxu0 0
        %1625 = vmatpush1.bf16.msra.mxu0 0
        %1626 = vmatprep.subr.bf16.mxu0 0
        %1627 = vmatpush1.bf16.msra.mxu0 0
        %1628 = vmatprep.subr.bf16.mxu0 0
        %1629 = vmatpush1.bf16.msra.mxu0 0
        %1630 = vmatprep.subr.bf16.mxu0 0
        %1631 = vmatpush1.bf16.msra.mxu0 0
        %1632 = vmatprep.subr.bf16.mxu0 0
        %1633 = vmatpush1.bf16.msra.mxu0 0
        %1634 = vmatprep.subr.bf16.mxu0 0
        %1635 = vmatpush1.bf16.msra.mxu0 0
        %1636 = vmatprep.subr.bf16.mxu0 0
        %1637 = vmatpush1.bf16.msra.mxu0 0
        %1638 = vmatprep.subr.bf16.mxu0 0
        %1639 = vmatpush1.bf16.msra.mxu0 0
        %1640 = vmatprep.subr.bf16.mxu0 0
        %1641 = vmatpush1.bf16.msra.mxu0 0
        %1642 = vmatprep.subr.bf16.mxu0 0
        %1643 = vmatpush1.bf16.msra.mxu0 0
        %1644 = vmatprep.subr.bf16.mxu0 0
        %1645 = vmatpush1.bf16.msra.mxu0 0
        %1646 = vmatprep.mubr.bf16.mxu0 0
        %1647 = vmatmul.mubr.bf16.gmra.mrb[0].mxu0 %v1612
        %v1648 = vpop.f32.mrb[0].mxu0
        %v1649 = vadd.f32 %v1598, %v1648
        %v1650 = vpop.f32.mrb[0].mxu0
        %v1651 = vpop.f32.mrb[0].mxu0
        %v1652 = vpop.f32.mrb[0].mxu0
        %1653 = vdwg.mxu0
        %v1654 = vadd.f32 %v1143, %v1649
        %v1655 = vsel %vm630, %v1654, 0.0
        %1656 = vadd.xlane.f32.xlu0 %v1655
        %v1657 = vpop.xlane.xlu0 %1656
        %v1658 = vmul.f32 %v1657, %v634
        %v1659 = vsub.f32 %v1654, %v1658
        %v1660 = vmul.f32 %v1659, %v1659
        %v1661 = vsel %vm630, %v1660, 0.0
        %1662 = vadd.xlane.f32.xlu0 %v1661
        %v1663 = vpop.xlane.xlu0 %1662
        %v1664 = vmul.f32 %v1663, %v634
        %v1665 = vadd.f32 %v1664, 1e-06
        %v1666 = vrsqrt.pop %v1665
        %v1667 = vmul.f32 %v1659, %v1666
        %v1668 = vlaneseq
        %v1669 = vshrl.u32 %v1668, 7
        %v1670 = vsub.s32 2, %v1669
        %v1671 = vrot.slane %v625, %v1670
        %v1672 = vmul.f32 %v1667, %v1671
        %v1673 = vlaneseq
        %v1674 = vshrl.u32 %v1673, 7
        %v1675 = vsub.s32 2, %v1674
        %v1676 = vrot.slane %v626, %v1675
        %v1677 = vadd.f32 %v1672, %v1676
        %v1678 = vpack.c.bf16 %v1677, %v1677
        %v1679 = vld [vmem:[#allocation9] sm:$0xf]
        %v1680 = vld [vmem:[#allocation9 + $0x4] sm:$0xf]
        %v1681 = vld [vmem:[#allocation9 + $0x8] sm:$0xf]
        %v1682 = vld [vmem:[#allocation9 + $0xc] sm:$0xf]
        %v1683 = vld [vmem:[#allocation11] sm:$0x1]
        %v1685 = vlaneseq
        %v1686 = vshrl.u32 %v1685, 7
        %v1687 = vsub.s32 0, %v1686
        %v1688 = vrot.slane %v1683, %v1687
        %v1694 = vunpack.c.l.b16 %v1679
        %v1695 = vunpack.c.l.b16 %v1680
        %v1696 = vunpack.c.l.b16 %v1681
        %v1697 = vunpack.c.l.b16 %v1682
        %v1698 = vpack.c.b16 %v1695, %v1694
        %v1699 = vpack.c.b16 %v1697, %v1696
        %v1703 = vsel %vm630, %v1678, 0
        %1705 = vmatprep.subr.bf16.mxu0 0
        %1706 = vmatpush1.bf16.msra.mxu0 %v1698
        %1707 = vmatprep.subr.bf16.mxu0 0
        %1708 = vmatpush1.bf16.msra.mxu0 %v1699
        %1709 = vmatprep.subr.bf16.mxu0 0
        %1710 = vmatpush1.bf16.msra.mxu0 0
        %1711 = vmatprep.subr.bf16.mxu0 0
        %1712 = vmatpush1.bf16.msra.mxu0 0
        %1713 = vmatprep.subr.bf16.mxu0 0
        %1714 = vmatpush1.bf16.msra.mxu0 0
        %1715 = vmatprep.subr.bf16.mxu0 0
        %1716 = vmatpush1.bf16.msra.mxu0 0
        %1717 = vmatprep.subr.bf16.mxu0 0
        %1718 = vmatpush1.bf16.msra.mxu0 0
        %1719 = vmatprep.subr.bf16.mxu0 0
        %1720 = vmatpush1.bf16.msra.mxu0 0
        %1721 = vmatprep.subr.bf16.mxu0 0
        %1722 = vmatpush1.bf16.msra.mxu0 0
        %1723 = vmatprep.subr.bf16.mxu0 0
        %1724 = vmatpush1.bf16.msra.mxu0 0
        %1725 = vmatprep.subr.bf16.mxu0 0
        %1726 = vmatpush1.bf16.msra.mxu0 0
        %1727 = vmatprep.subr.bf16.mxu0 0
        %1728 = vmatpush1.bf16.msra.mxu0 0
        %1729 = vmatprep.subr.bf16.mxu0 0
        %1730 = vmatpush1.bf16.msra.mxu0 0
        %1731 = vmatprep.subr.bf16.mxu0 0
        %1732 = vmatpush1.bf16.msra.mxu0 0
        %1733 = vmatprep.subr.bf16.mxu0 0
        %1734 = vmatpush1.bf16.msra.mxu0 0
        %1735 = vmatprep.subr.bf16.mxu0 0
        %1736 = vmatpush1.bf16.msra.mxu0 0
        %1737 = vmatprep.mubr.bf16.mxu0 0
        %1738 = vmatmul.mubr.bf16.gmra.mrb[0].mxu0 %v1703
        %v1739 = vpop.f32.mrb[0].mxu0
        %v1740 = vadd.f32 %v1688, %v1739
        %v1741 = vpop.f32.mrb[0].mxu0
        %v1742 = vpop.f32.mrb[0].mxu0
        %v1743 = vpop.f32.mrb[0].mxu0
        %1744 = vdwg.mxu0
        %v1745 = vmax.f32 %v1740, 0.0
        %v1746 = vpack.c.bf16 %v1745, %v1745
        %v1747 = vld [vmem:[%s10] sm:$0xf]
        %v1748 = vld [vmem:[%s10 + $0x4] sm:$0xf]
        %v1749 = vld [vmem:[%s10 + $0x8] sm:$0xf]
        %v1750 = vld [vmem:[%s10 + $0xc] sm:$0xf]
        %v1751 = vld [vmem:[%s10 + $0x10] sm:$0xf]
        %v1752 = vld [vmem:[%s10 + $0x14] sm:$0xf]
        %v1753 = vld [vmem:[%s10 + $0x18] sm:$0xf]
        %v1754 = vld [vmem:[%s10 + $0x1c] sm:$0xf]
        %v1763 = vunpack.c.l.b16 %v1747
        %v1764 = vunpack.c.l.b16 %v1748
        %v1765 = vunpack.c.l.b16 %v1749
        %v1766 = vunpack.c.l.b16 %v1750
        %v1767 = vunpack.c.l.b16 %v1751
        %v1768 = vunpack.c.l.b16 %v1752
        %v1769 = vunpack.c.l.b16 %v1753
        %v1770 = vunpack.c.l.b16 %v1754
        %v1771 = vpack.c.b16 %v1764, %v1763
        %v1772 = vpack.c.b16 %v1766, %v1765
        %v1773 = vpack.c.b16 %v1768, %v1767
        %v1774 = vpack.c.b16 %v1770, %v1769
        %vm1779 = vcmask 523264
        %v1781 = vsel %vm1779, %v1746, 0
        %1783 = vmatprep.subr.bf16.mxu0 0
        %1784 = vmatpush1.bf16.msra.mxu0 %v1771
        %1785 = vmatprep.subr.bf16.mxu0 0
        %1786 = vmatpush1.bf16.msra.mxu0 %v1772
        %1787 = vmatprep.subr.bf16.mxu0 0
        %1788 = vmatpush1.bf16.msra.mxu0 %v1773
        %1789 = vmatprep.subr.bf16.mxu0 0
        %1790 = vmatpush1.bf16.msra.mxu0 %v1774
        %1791 = vmatprep.subr.bf16.mxu0 0
        %1792 = vmatpush1.bf16.msra.mxu0 0
        %1793 = vmatprep.subr.bf16.mxu0 0
        %1794 = vmatpush1.bf16.msra.mxu0 0
        %1795 = vmatprep.subr.bf16.mxu0 0
        %1796 = vmatpush1.bf16.msra.mxu0 0
        %1797 = vmatprep.subr.bf16.mxu0 0
        %1798 = vmatpush1.bf16.msra.mxu0 0
        %1799 = vmatprep.subr.bf16.mxu0 0
        %1800 = vmatpush1.bf16.msra.mxu0 0
        %1801 = vmatprep.subr.bf16.mxu0 0
        %1802 = vmatpush1.bf16.msra.mxu0 0
        %1803 = vmatprep.subr.bf16.mxu0 0
        %1804 = vmatpush1.bf16.msra.mxu0 0
        %1805 = vmatprep.subr.bf16.mxu0 0
        %1806 = vmatpush1.bf16.msra.mxu0 0
        %1807 = vmatprep.subr.bf16.mxu0 0
        %1808 = vmatpush1.bf16.msra.mxu0 0
        %1809 = vmatprep.subr.bf16.mxu0 0
        %1810 = vmatpush1.bf16.msra.mxu0 0
        %1811 = vmatprep.subr.bf16.mxu0 0
        %1812 = vmatpush1.bf16.msra.mxu0 0
        %1813 = vmatprep.subr.bf16.mxu0 0
        %1814 = vmatpush1.bf16.msra.mxu0 0
        %1815 = vmatprep.mubr.bf16.mxu0 0
        %1816 = vmatmul.mubr.bf16.gmra.mrb[0].mxu0 %v1781
        %v1817 = vpop.f32.mrb[0].mxu0
        %v1818 = vadd.f32 0.0, %v1817
        %v1819 = vpop.f32.mrb[0].mxu0
        %v1820 = vpop.f32.mrb[0].mxu0
        %v1821 = vpop.f32.mrb[0].mxu0
        %1822 = vdwg.mxu0
        %v1823 = vadd.f32 %v1654, %v1818
        %v1824 = vld [vmem:[#allocation12] sm:$0x1]
        %v1826 = vlaneseq
        %v1827 = vshrl.u32 %v1826, 7
        %v1828 = vsub.s32 0, %v1827
        %v1829 = vrot.slane %v1824, %v1828
        %v1831 = vadd.f32 %v1823, %v1829
        %1832 = vst.msk [vmem:[%s611] sm:$0xff] %vm630, %v1831
        %s1833 = sand.u32 %s357, 1
        %s1834 = scalar_lea.sflag [#allocation5], %s1833
        %s1835 = sand.u32 %s357, 1
        %s1836 = smul.addr %s1835, 8
        %s1837 = scalar_lea.vmem [#allocation17], %s1836
        // Predicated region
        $region109: #{decoder_block_forward.1} parent=75 // pred_check
          %p1838 = pneg %p367
        $region110: #{decoder_block_forward.1} parent=75 // pred_check_branch
          %1840 = sbr.rel (%p1838) target = $region112
        $region111: #{decoder_block_forward.1} parent=75 // pred_region
          %s1842 = ssub.s32 128, 128
          %1843 = vsyncadd %s1834, %s1842
          %s1844 = smul.addr %s35, 128
          %s1845 = scalar_lea.hbm %s14, %s1844
          %s1847 = sshll.u32 %s1837, 4
          %s1848 = int_to_ptr.vmem [resolvable:$true] %s1847
          %1850 = dma.vmem_to_hbm [thread:$0]  %s1848, 128, %s1845, %s1834
        $region112: #{decoder_block_forward.1} parent=75 // pred_fallthru
          _
      $region76: #{decoder_block_forward.1} parent=5 // pred_fallthru
        _
      %p1851 = scmp.le.s32.totalorder 2, %s30
      // Predicated region
      $region113: #{decoder_block_forward.1} parent=5 // pred_check
        %p1852 = pneg %p1851
      $region114: #{decoder_block_forward.1} parent=5 // pred_check_branch
        %1854 = sbr.rel (%p1852) target = $region116
      $region115: #{decoder_block_forward.1} parent=5 // pred_region
        %s1855 = ssub.s32 %s30, 2
        // Predicated region
        $region117: #{decoder_block_forward.1} parent=115 // pred_check
          %p1856 = pneg %p373
        $region118: #{decoder_block_forward.1} parent=115 // pred_check_branch
          %1858 = sbr.rel (%p1856) target = $region120
        $region119: #{decoder_block_forward.1} parent=115 // pred_region
          %s1859 = sand.u32 %s358, 1
          %s1860 = scalar_lea.sflag [#allocation5], %s1859
          %s1861 = sand.u32 %s358, 1
          %s1862 = smul.addr %s1861, 8
          %s1863 = scalar_lea.vmem [#allocation17], %s1862
          %1864 = dma.done %s1860, 128
        $region120: #{decoder_block_forward.1} parent=115 // pred_fallthru
          _
      $region116: #{decoder_block_forward.1} parent=5 // pred_fallthru
        _
    $region6: #{decoder_block_forward.1} parent=1 // loop_footer
      %s34 = sadd.s32 1, %s30
    $region7: #{decoder_block_forward.1} parent=1 // loop_footer_branch
      %29 = sbr.rel target = $region3
    $region8: #{decoder_block_forward.1} parent=1 // loop_exit
      _
    %1865 = vsyncpa [#allocation4], 1
    %s1866 = scalar_lea.sflag [#allocation4], 1
    %1867 = vsyncpa %s1866, 1
    %1868 = vsyncpa [#allocation7], 1
    %1869 = vsyncpa [#allocation10], 1
    %1870 = vsyncpa [#allocation13], 1
    %1871 = vsyncpa [#allocation16], 1
    %1872 = vsyncpa [#allocation5], 1
    %s1873 = scalar_lea.sflag [#allocation5], 1
    %1874 = vsyncpa %s1873, 1

</llo_original>
